<compile_context>
chip_gen: v6e
topology: v6e:2x2x1
jax: 0.10.0
libtpu: 0.0.40
codegen_flags: <defaults>
</compile_context>

<pallas_src>
import functools

import jax
import jax.numpy as jnp
from jax.experimental import pallas as pl
from jax.experimental.pallas import tpu as pltpu

_LANE = 128
_LOG_CLAMP = -100.0       # F.binary_cross_entropy clamps log terms at -100
_STATS_ROWS = 8           # one (8,128) stats block per tile
_TOPK_LEVELS = 7          # 4-bit radix levels run in-kernel (key bits 27..0)


def _round_up(x, m):
    return ((x + m - 1) // m) * m


def _cdiv(a, b):
    return (a + b - 1) // b


# ---------------------------------------------------------------------------
# Kernel 1: elementwise BCE + per-tile reductions + top-k key emission.
# ---------------------------------------------------------------------------
def _make_bce_kernel(block_rows, m_rows, binary_gt, needs_mask):

    def body(pred, gt, mask, key_ref, stats_ref):
        if binary_gt:
            # gt strictly in {0,1}: one log instead of two (EUP relief).
            sel = jnp.where(gt > 0.5, pred, 1.0 - pred)
            loss = -jnp.maximum(jnp.log(sel), _LOG_CLAMP)
        else:
            log_p = jnp.maximum(jnp.log(pred), _LOG_CLAMP)
            log_1mp = jnp.maximum(jnp.log(1.0 - pred), _LOG_CLAMP)
            loss = -(gt * log_p + (1.0 - gt) * log_1mp)

        pos = gt * mask
        neg = mask - pos                  # == (1 - gt) * mask
        loss_m = loss * mask
        pos_loss = loss_m * gt            # == loss * pos
        neg_loss = loss_m - pos_loss      # == loss * neg

        # int32 top-k key: bit pattern of the non-negative negative loss
        # (orders like the value), 0 for everything else.
        key = jnp.where(neg_loss > 0.0,
                        pltpu.bitcast(neg_loss, jnp.int32),
                        0)
        key_ref[...] = key

        # Per-tile per-lane partial reductions, assembled in registers and
        # written with a single full-tile store.
        rows = [
            jnp.sum(pos_loss, axis=0, keepdims=True),
            jnp.sum(pos, axis=0, keepdims=True),
            jnp.sum(neg, axis=0, keepdims=True),
        ]
        # Free level-0 radix histogram: losses are clamped (<= 100 << 2**33),
        # so the top 4 key bits are <= 4 and thresholds 1..4 << 28 suffice.
        for d in range(1, 5):
            rows.append(jnp.sum(jnp.where(key >= (d << 28), 1.0, 0.0),
                                axis=0, keepdims=True))
        rows.append(jnp.zeros((1, _LANE), jnp.float32))
        stats_ref[...] = jnp.concatenate(rows, axis=0)

    def kernel(pred_ref, gt_ref, mask_ref, key_ref, stats_ref):
        pred = pred_ref[...].astype(jnp.float32)
        gt = gt_ref[...].astype(jnp.float32)
        mask = mask_ref[...].astype(jnp.float32)

        if needs_mask:
            last = pl.num_programs(0) - 1

            @pl.when(pl.program_id(0) != last)
            def _():
                body(pred, gt, mask, key_ref, stats_ref)

            @pl.when(pl.program_id(0) == last)
            def _():
                # Ragged last tile: rows past m_rows may contain garbage.
                # Sanitize so every downstream value is finite, contributes 0,
                # and yields key == 0 (so it never enters the radix search).
                valid_rows = m_rows - last * block_rows
                rid = jax.lax.broadcasted_iota(jnp.int32,
                                               (block_rows, _LANE), 0)
                v = rid < valid_rows
                body(jnp.where(v, pred, 0.5),
                     jnp.where(v, gt, 0.0),
                     jnp.where(v, mask, 0.0),
                     key_ref, stats_ref)
        else:
            body(pred, gt, mask, key_ref, stats_ref)

    return kernel


# ---------------------------------------------------------------------------
# Kernel 2: lane-dense radix top-k threshold search + fused tie-corrected sum.
# ---------------------------------------------------------------------------
def _make_topk_kernel(block_rows, m_rows, needs_mask):
    last_level = _TOPK_LEVELS - 1

    def kernel(scal_ref, key_ref, s_ref, c_ref, p_ref,
               prefix_sm, cnt_vmem, sum_vmem):
        level = pl.program_id(0)
        tile = pl.program_id(1)
        last_tile = pl.num_programs(1) - 1

        @pl.when(jnp.logical_and(level == 0, tile == 0))
        def _():
            prefix_sm[0] = scal_ref[1]          # level-0 prefix from kernel 1
            s_ref[...] = jnp.zeros((1, _LANE), jnp.float32)
            c_ref[...] = jnp.zeros((1, _LANE), jnp.float32)
            p_ref[...] = jnp.zeros((1, _LANE), jnp.int32)

        @pl.when(tile == 0)
        def _():
            cnt_vmem[...] = jnp.zeros_like(cnt_vmem)
            sum_vmem[...] = jnp.zeros_like(sum_vmem)

        shift = (last_level - level) * 4
        prefix = prefix_sm[0]

        keys = key_ref[...]
        if needs_mask:
            valid_rows = m_rows - tile * block_rows
            rid = jax.lax.broadcasted_iota(jnp.int32, keys.shape, 0)
            keys = jnp.where(rid < valid_rows, keys, 0)

        # Per-candidate per-lane counts (and, on the last level, value sums),
        # accumulated across tiles in VMEM scratch.
        @pl.when(level != last_level)
        def _():
            rows = []
            for d in range(16):
                cand = prefix + (d << shift)
                rows.append(jnp.sum(jnp.where(keys >= cand, 1.0, 0.0),
                                    axis=0, keepdims=True))
            cnt_vmem[...] += jnp.concatenate(rows, axis=0)

        @pl.when(level == last_level)
        def _():
            vals = pltpu.bitcast(keys, jnp.float32)
            crows, srows = [], []
            for d in range(16):
                cand = prefix + (d << shift)
                m = keys >= cand
                crows.append(jnp.sum(jnp.where(m, 1.0, 0.0),
                                     axis=0, keepdims=True))
                srows.append(jnp.sum(jnp.where(m, vals, 0.0),
                                     axis=0, keepdims=True))
            cnt_vmem[...] += jnp.concatenate(crows, axis=0)
            sum_vmem[...] += jnp.concatenate(srows, axis=0)

        # Resolve this level's digit once all tiles have been counted.
        @pl.when(tile == last_tile)
        def _():
            k_f = scal_ref[0].astype(jnp.float32)
            best_d = jnp.int32(0)
            best_cnt = jnp.sum(cnt_vmem[0:1, :])
            best_sum = jnp.sum(sum_vmem[0:1, :])
            for d in range(1, 16):
                tot = jnp.sum(cnt_vmem[d:d + 1, :])
                stot = jnp.sum(sum_vmem[d:d + 1, :])
                take = tot >= k_f
                best_d = jnp.where(take, jnp.int32(d), best_d)
                best_cnt = jnp.where(take, tot, best_cnt)
                best_sum = jnp.where(take, stot, best_sum)
            new_prefix = prefix + (best_d << shift)
            prefix_sm[0] = new_prefix

            @pl.when(level == last_level)
            def _():
                # new_prefix is the exact bit pattern of the k-th largest
                # value; best_cnt / best_sum are count / sum of values >= it.
                s_ref[...] = jnp.full((1, _LANE), best_sum, jnp.float32)
                c_ref[...] = jnp.full((1, _LANE), best_cnt, jnp.float32)
                p_ref[...] = jnp.full((1, _LANE), new_prefix, jnp.int32)

    return kernel


# ---------------------------------------------------------------------------
# Wrapper: matches BCELoss.forward(pred, gt, mask) from the PyTorch module.
# ---------------------------------------------------------------------------
def balanced_bce_loss(pred, gt, mask, negative_ratio, eps=1e-6,
                      binary_gt=False, max_block_rows=1024):
    total = pred.size
    pred = pred.reshape(-1)
    gt = gt.reshape(-1)
    mask = mask.reshape(-1)

    rem = total % _LANE
    if rem:
        # Rare: non-128-aligned element counts take one small pad copy.
        pad = _LANE - rem
        pred = jnp.pad(pred, (0, pad), constant_values=0.5)
        gt = jnp.pad(gt, (0, pad))
        mask = jnp.pad(mask, (0, pad))

    m_rows = _cdiv(total, _LANE)
    pred2 = pred.reshape(m_rows, _LANE)
    gt2 = gt.reshape(m_rows, _LANE)
    mask2 = mask.reshape(m_rows, _LANE)

    # Tile sizing: big lane-dense tiles, but aim for >= 4 grid steps so the
    # "parallel" axis can shard across both v7x TensorCores.  Rows are rounded
    # to 32 so int8 gt/mask tiles stay legal.
    if m_rows <= 32:
        block_rows = m_rows
    else:
        block_rows = max(32, min(max_block_rows,
                                 _round_up(_cdiv(m_rows, 4), 32)))
    num_tiles = _cdiv(m_rows, block_rows)
    needs_mask = (m_rows % block_rows) != 0

    tile_spec = pl.BlockSpec((block_rows, _LANE), lambda i: (i, 0))
    bce_kernel = _make_bce_kernel(block_rows, m_rows, binary_gt, needs_mask)

    negkey, stats = pl.pallas_call(
        bce_kernel,
        out_shape=(
            jax.ShapeDtypeStruct((m_rows, _LANE), jnp.int32),
            jax.ShapeDtypeStruct((num_tiles * _STATS_ROWS, _LANE),
                                 jnp.float32),
        ),
        grid=(num_tiles,),
        in_specs=[tile_spec, tile_spec, tile_spec],
        out_specs=(
            pl.BlockSpec((block_rows, _LANE), lambda i: (i, 0)),
            pl.BlockSpec((_STATS_ROWS, _LANE), lambda i: (i, 0)),
        ),
        compiler_params=pltpu.CompilerParams(
            dimension_semantics=("parallel",)),
    )(pred2, gt2, mask2)

    stats = stats.reshape(num_tiles, _STATS_ROWS, _LANE)
    pos_loss_sum = jnp.sum(stats[:, 0, :])
    # int(...) in PyTorch truncates; counts are non-negative so floor matches.
    pos_count = jnp.floor(jnp.sum(stats[:, 1, :]))
    neg_total = jnp.floor(jnp.sum(stats[:, 2, :]))
    neg_count = jnp.minimum(neg_total, jnp.floor(pos_count * negative_ratio))

    # Resolve radix level 0 (top 4 key bits) from the free in-kernel histogram.
    hist = jnp.sum(stats[:, 3:7, :], axis=(0, 2))     # thresholds 1..4 << 28
    prefix0 = jnp.int32(0)
    for d in range(1, 5):
        prefix0 = jnp.where(hist[d - 1] >= neg_count,
                            jnp.int32(d << 28), prefix0)

    scalars = jnp.stack([neg_count.astype(jnp.int32), prefix0])

    topk_kernel = _make_topk_kernel(block_rows, m_rows, needs_mask)
    key_spec = pl.BlockSpec((block_rows, _LANE), lambda l, t, s: (t, 0))
    out_row = lambda: pl.BlockSpec((1, _LANE), lambda l, t, s: (0, 0))

    s_ge, c_ge, kth_bits = pl.pallas_call(
        topk_kernel,
        out_shape=(
            jax.ShapeDtypeStruct((1, _LANE), jnp.float32),
            jax.ShapeDtypeStruct((1, _LANE), jnp.float32),
            jax.ShapeDtypeStruct((1, _LANE), jnp.int32),
        ),
        grid_spec=pltpu.PrefetchScalarGridSpec(
            num_scalar_prefetch=1,
            grid=(_TOPK_LEVELS, num_tiles),
            in_specs=[key_spec],
            out_specs=(out_row(), out_row(), out_row()),
            scratch_shapes=[
                pltpu.SMEM((1,), jnp.int32),
                pltpu.VMEM((16, _LANE), jnp.float32),
                pltpu.VMEM((16, _LANE), jnp.float32),
            ]),
        compiler_params=pltpu.CompilerParams(
            dimension_semantics=("arbitrary", "arbitrary")),
    )(scalars, negkey)

    # Tie-corrected top-k sum: sum(x >= kth) - (count(x >= kth) - k) * kth.
    kth_val = jax.lax.bitcast_convert_type(kth_bits[0, 0], jnp.float32)
    topk_sum = s_ge[0, 0] - (c_ge[0, 0] - neg_count) * kth_val
    topk_sum = jnp.where(neg_count > 0, topk_sum, 0.0)

    return (pos_loss_sum + topk_sum) / (pos_count + neg_count + eps)


# ---------------------------------------------------------------------------
# Plain-JAX reference mirroring the PyTorch module (sort-based top-k).
# ---------------------------------------------------------------------------
def _reference_loss(pred, gt, mask, negative_ratio, eps=1e-6):
    pred = pred.astype(jnp.float32)
    gt = gt.astype(jnp.float32)
    mask = mask.astype(jnp.float32)
    positive = gt * mask
    negative = (1.0 - gt) * mask
    pos_count = jnp.floor(jnp.sum(positive))
    neg_count = jnp.minimum(jnp.floor(jnp.sum(negative)),
                            jnp.floor(pos_count * negative_ratio))
    loss = -(gt * jnp.maximum(jnp.log(pred), _LOG_CLAMP)
             + (1.0 - gt) * jnp.maximum(jnp.log(1.0 - pred), _LOG_CLAMP))
    pos_loss = loss * positive
    neg_loss = (loss * negative).reshape(-1)
    sorted_desc = jnp.sort(neg_loss)[::-1]
    idx = jnp.arange(neg_loss.shape[0], dtype=jnp.int32)
    topk_sum = jnp.sum(jnp.where(idx < neg_count.astype(jnp.int32),
                                 sorted_desc, 0.0))
    return (jnp.sum(pos_loss) + topk_sum) / (pos_count + neg_count + eps)


if __name__ == "__main__":
    B, C, H, W = 2, 4, 16, 16
    negative_ratio = 3.0

    key = jax.random.PRNGKey(0)
    k_pred, k_gt, k_mask = jax.random.split(key, 3)

    pred = jax.random.uniform(k_pred, (B, C, H, W), jnp.float32,
                              minval=0.01, maxval=0.99)
    # gt/mask are exact 0/1 -> bf16 (or int8) is lossless and cuts HBM traffic.
    gt = (jax.random.uniform(k_gt, (B, C, H, W)) < 0.2).astype(jnp.bfloat16)
    mask = (jax.random.uniform(k_mask, (B, C, H, W)) < 0.9).astype(jnp.bfloat16)

    loss_fn = jax.jit(functools.partial(balanced_bce_loss,
                                        negative_ratio=negative_ratio,
                                        binary_gt=True))
    out = jax.block_until_ready(loss_fn(pred, gt, mask))

    ref = jax.block_until_ready(_reference_loss(pred, gt, mask, negative_ratio))
    assert jnp.allclose(out, ref, rtol=1e-4, atol=1e-6), (out, ref)

    print("KERNEL_OK")
</pallas_src>

<mosaic_0001>
module attributes {stable_mosaic.version = 11 : i64} {
  func.func @kernel(%arg0: i32, %arg1: memref<16x128xf32, #tpu.memory_space<vmem>>, %arg2: memref<16x128xbf16, #tpu.memory_space<vmem>>, %arg3: memref<16x128xbf16, #tpu.memory_space<vmem>>, %arg4: memref<16x128xi32, #tpu.memory_space<vmem>>, %arg5: memref<8x128xf32, #tpu.memory_space<vmem>>) attributes {dimension_semantics = [#tpu.dimension_semantics<parallel>], iteration_bounds = array<i64: 1>, scalar_prefetch = 0 : i64, scratch_operands = 0 : i64, tpu.core_type = #tpu.core_type<tc>, window_params = [{transform_indices = @transform_0, window_bounds = array<i64: 16, 128>}, {transform_indices = @transform_1, window_bounds = array<i64: 16, 128>}, {transform_indices = @transform_2, window_bounds = array<i64: 16, 128>}, {transform_indices = @transform_3, window_bounds = array<i64: 16, 128>}, {transform_indices = @transform_4, window_bounds = array<i64: 8, 128>}]} {
    %c0 = arith.constant 0 : index
    %c0_0 = arith.constant 0 : index
    %0 = vector.load %arg1[%c0, %c0_0] : memref<16x128xf32, #tpu.memory_space<vmem>>, vector<16x128xf32>
    %c0_1 = arith.constant 0 : index
    %c0_2 = arith.constant 0 : index
    %1 = vector.load %arg2[%c0_1, %c0_2] : memref<16x128xbf16, #tpu.memory_space<vmem>>, vector<16x128xbf16>
    %2 = arith.extf %1 : vector<16x128xbf16> to vector<16x128xf32>
    %c0_3 = arith.constant 0 : index
    %c0_4 = arith.constant 0 : index
    %3 = vector.load %arg3[%c0_3, %c0_4] : memref<16x128xbf16, #tpu.memory_space<vmem>>, vector<16x128xbf16>
    %4 = arith.extf %3 : vector<16x128xbf16> to vector<16x128xf32>
    %cst = arith.constant 5.000000e-01 : f32
    %5 = vector.broadcast %cst : f32 to vector<16x128xf32>
    %6 = arith.cmpf ogt, %2, %5 : vector<16x128xf32>
    %cst_5 = arith.constant 1.000000e+00 : f32
    %7 = vector.broadcast %cst_5 : f32 to vector<16x128xf32>
    %8 = arith.subf %7, %0 : vector<16x128xf32>
    %9 = arith.select %6, %0, %8 : vector<16x128xi1>, vector<16x128xf32>
    %10 = math.log %9 : vector<16x128xf32>
    %cst_6 = arith.constant -1.000000e+02 : f32
    %11 = vector.broadcast %cst_6 : f32 to vector<16x128xf32>
    %12 = arith.maximumf %10, %11 : vector<16x128xf32>
    %cst_7 = arith.constant 0.000000e+00 : f32
    %13 = vector.broadcast %cst_7 : f32 to vector<16x128xf32>
    %14 = arith.subf %13, %12 : vector<16x128xf32>
    %15 = arith.mulf %2, %4 : vector<16x128xf32>
    %16 = arith.subf %4, %15 : vector<16x128xf32>
    %17 = arith.mulf %14, %4 : vector<16x128xf32>
    %18 = arith.mulf %17, %2 : vector<16x128xf32>
    %19 = arith.subf %17, %18 : vector<16x128xf32>
    %cst_8 = arith.constant 0.000000e+00 : f32
    %20 = vector.broadcast %cst_8 : f32 to vector<16x128xf32>
    %21 = arith.cmpf ogt, %19, %20 : vector<16x128xf32>
    %22 = tpu.bitcast %19 : vector<16x128xf32> -> vector<16x128xi32>
    %c0_i32 = arith.constant 0 : i32
    %23 = vector.broadcast %c0_i32 : i32 to vector<16x128xi32>
    %24 = arith.select %21, %22, %23 : vector<16x128xi1>, vector<16x128xi32>
    %c0_9 = arith.constant 0 : index
    %c0_10 = arith.constant 0 : index
    %25 = vector.load %arg4[%c0_9, %c0_10] : memref<16x128xi32, #tpu.memory_space<vmem>>, vector<16x128xi32>
    tpu.vector_store %arg4[%c0_9, %c0_10], %24 {strides = array<i32>} : memref<16x128xi32, #tpu.memory_space<vmem>>, vector<16x128xi32>,
    %cst_11 = arith.constant dense<0.000000e+00> : vector<128xf32>
    %26 = vector.multi_reduction <add>, %18, %cst_11 [0] : vector<16x128xf32> to vector<128xf32>
    %27 = vector.shape_cast %26 : vector<128xf32> to vector<1x128xf32>
    %cst_12 = arith.constant dense<0.000000e+00> : vector<128xf32>
    %28 = vector.multi_reduction <add>, %15, %cst_12 [0] : vector<16x128xf32> to vector<128xf32>
    %29 = vector.shape_cast %28 : vector<128xf32> to vector<1x128xf32>
    %cst_13 = arith.constant dense<0.000000e+00> : vector<128xf32>
    %30 = vector.multi_reduction <add>, %16, %cst_13 [0] : vector<16x128xf32> to vector<128xf32>
    %31 = vector.shape_cast %30 : vector<128xf32> to vector<1x128xf32>
    %c268435456_i32 = arith.constant 268435456 : i32
    %32 = vector.broadcast %c268435456_i32 : i32 to vector<16x128xi32>
    %33 = arith.cmpi sge, %24, %32 : vector<16x128xi32>
    %cst_14 = arith.constant 1.000000e+00 : f32
    %cst_15 = arith.constant 0.000000e+00 : f32
    %34 = vector.broadcast %cst_14 : f32 to vector<16x128xf32>
    %35 = vector.broadcast %cst_15 : f32 to vector<16x128xf32>
    %36 = arith.select %33, %34, %35 : vector<16x128xi1>, vector<16x128xf32>
    %cst_16 = arith.constant dense<0.000000e+00> : vector<128xf32>
    %37 = vector.multi_reduction <add>, %36, %cst_16 [0] : vector<16x128xf32> to vector<128xf32>
    %38 = vector.shape_cast %37 : vector<128xf32> to vector<1x128xf32>
    %c536870912_i32 = arith.constant 536870912 : i32
    %39 = vector.broadcast %c536870912_i32 : i32 to vector<16x128xi32>
    %40 = arith.cmpi sge, %24, %39 : vector<16x128xi32>
    %cst_17 = arith.constant 1.000000e+00 : f32
    %cst_18 = arith.constant 0.000000e+00 : f32
    %41 = vector.broadcast %cst_17 : f32 to vector<16x128xf32>
    %42 = vector.broadcast %cst_18 : f32 to vector<16x128xf32>
    %43 = arith.select %40, %41, %42 : vector<16x128xi1>, vector<16x128xf32>
    %cst_19 = arith.constant dense<0.000000e+00> : vector<128xf32>
    %44 = vector.multi_reduction <add>, %43, %cst_19 [0] : vector<16x128xf32> to vector<128xf32>
    %45 = vector.shape_cast %44 : vector<128xf32> to vector<1x128xf32>
    %c805306368_i32 = arith.constant 805306368 : i32
    %46 = vector.broadcast %c805306368_i32 : i32 to vector<16x128xi32>
    %47 = arith.cmpi sge, %24, %46 : vector<16x128xi32>
    %cst_20 = arith.constant 1.000000e+00 : f32
    %cst_21 = arith.constant 0.000000e+00 : f32
    %48 = vector.broadcast %cst_20 : f32 to vector<16x128xf32>
    %49 = vector.broadcast %cst_21 : f32 to vector<16x128xf32>
    %50 = arith.select %47, %48, %49 : vector<16x128xi1>, vector<16x128xf32>
    %cst_22 = arith.constant dense<0.000000e+00> : vector<128xf32>
    %51 = vector.multi_reduction <add>, %50, %cst_22 [0] : vector<16x128xf32> to vector<128xf32>
    %52 = vector.shape_cast %51 : vector<128xf32> to vector<1x128xf32>
    %c1073741824_i32 = arith.constant 1073741824 : i32
    %53 = vector.broadcast %c1073741824_i32 : i32 to vector<16x128xi32>
    %54 = arith.cmpi sge, %24, %53 : vector<16x128xi32>
    %cst_23 = arith.constant 1.000000e+00 : f32
    %cst_24 = arith.constant 0.000000e+00 : f32
    %55 = vector.broadcast %cst_23 : f32 to vector<16x128xf32>
    %56 = vector.broadcast %cst_24 : f32 to vector<16x128xf32>
    %57 = arith.select %54, %55, %56 : vector<16x128xi1>, vector<16x128xf32>
    %cst_25 = arith.constant dense<0.000000e+00> : vector<128xf32>
    %58 = vector.multi_reduction <add>, %57, %cst_25 [0] : vector<16x128xf32> to vector<128xf32>
    %59 = vector.shape_cast %58 : vector<128xf32> to vector<1x128xf32>
    %cst_26 = arith.constant 0.000000e+00 : f32
    %60 = vector.broadcast %cst_26 : f32 to vector<1x128xf32>
    %61 = tpu.concatenate %27, %29, %31, %38, %45, %52, %59, %60 in 0 : vector<1x128xf32>, vector<1x128xf32>, vector<1x128xf32>, vector<1x128xf32>, vector<1x128xf32>, vector<1x128xf32>, vector<1x128xf32>, vector<1x128xf32> -> vector<8x128xf32>
    %c0_27 = arith.constant 0 : index
    %c0_28 = arith.constant 0 : index
    %62 = vector.load %arg5[%c0_27, %c0_28] : memref<8x128xf32, #tpu.memory_space<vmem>>, vector<8x128xf32>
    tpu.vector_store %arg5[%c0_27, %c0_28], %61 {strides = array<i32>} : memref<8x128xf32, #tpu.memory_space<vmem>>, vector<8x128xf32>,
    return
  }
  func.func @transform_0(%arg0: i32) -> (i32, i32) {
    %c0_i32 = arith.constant 0 : i32
    %c0_i32_0 = arith.constant 0 : i32
    return %arg0, %c0_i32 : i32, i32
  }
  func.func @transform_1(%arg0: i32) -> (i32, i32) {
    %c0_i32 = arith.constant 0 : i32
    %c0_i32_0 = arith.constant 0 : i32
    return %arg0, %c0_i32 : i32, i32
  }
  func.func @transform_2(%arg0: i32) -> (i32, i32) {
    %c0_i32 = arith.constant 0 : i32
    %c0_i32_0 = arith.constant 0 : i32
    return %arg0, %c0_i32 : i32, i32
  }
  func.func @transform_3(%arg0: i32) -> (i32, i32) {
    %c0_i32 = arith.constant 0 : i32
    %c0_i32_0 = arith.constant 0 : i32
    return %arg0, %c0_i32 : i32, i32
  }
  func.func @transform_4(%arg0: i32) -> (i32, i32) {
    %c0_i32 = arith.constant 0 : i32
    %c0_i32_0 = arith.constant 0 : i32
    return %arg0, %c0_i32 : i32, i32
  }
}

module attributes {stable_mosaic.version = 11 : i64} {
  func.func @kernel(%arg0: i32, %arg1: i32, %arg2: memref<2xi32, #tpu.memory_space<smem>>, %arg3: memref<16x128xi32, #tpu.memory_space<vmem>>, %arg4: memref<1x128xf32, #tpu.memory_space<vmem>>, %arg5: memref<1x128xf32, #tpu.memory_space<vmem>>, %arg6: memref<1x128xi32, #tpu.memory_space<vmem>>, %arg7: memref<1xi32, #tpu.memory_space<smem>>, %arg8: memref<16x128xf32, #tpu.memory_space<vmem>>, %arg9: memref<16x128xf32, #tpu.memory_space<vmem>>) attributes {dimension_semantics = [#tpu.dimension_semantics<arbitrary>, #tpu.dimension_semantics<arbitrary>], iteration_bounds = array<i64: 7, 1>, scalar_prefetch = 1 : i64, scratch_operands = 3 : i64, tpu.core_type = #tpu.core_type<tc>, window_params = [{transform_indices = @transform_0, window_bounds = array<i64: 16, 128>}, {pipeline_mode = #tpu.pipeline_mode<synchronous>, transform_indices = @transform_1, window_bounds = array<i64: 1, 128>}, {pipeline_mode = #tpu.pipeline_mode<synchronous>, transform_indices = @transform_2, window_bounds = array<i64: 1, 128>}, {pipeline_mode = #tpu.pipeline_mode<synchronous>, transform_indices = @transform_3, window_bounds = array<i64: 1, 128>}]} {
    %c0_i32 = arith.constant 0 : i32
    %0 = arith.cmpi eq, %arg0, %c0_i32 : i32
    %c0_i32_0 = arith.constant 0 : i32
    %1 = arith.cmpi eq, %arg1, %c0_i32_0 : i32
    %2 = arith.andi %0, %1 : i1
    %3 = arith.extui %2 : i1 to i32
    %c0_i32_1 = arith.constant 0 : i32
    %4 = arith.cmpi ne, %3, %c0_i32_1 : i32
    scf.if %4 {
      %c1 = arith.constant 1 : index
      %21 = memref.load %arg2[%c1] : memref<2xi32, #tpu.memory_space<smem>>
      %c0_12 = arith.constant 0 : index
      %22 = memref.load %arg7[%c0_12] : memref<1xi32, #tpu.memory_space<smem>>
      memref.store %21, %arg7[%c0_12] : memref<1xi32, #tpu.memory_space<smem>>
      %cst = arith.constant 0.000000e+00 : f32
      %23 = vector.broadcast %cst : f32 to vector<1x128xf32>
      %c0_13 = arith.constant 0 : index
      %c0_14 = arith.constant 0 : index
      %24 = vector.load %arg4[%c0_13, %c0_14] : memref<1x128xf32, #tpu.memory_space<vmem>>, vector<1x128xf32>
      tpu.vector_store %arg4[%c0_13, %c0_14], %23 {strides = array<i32>} : memref<1x128xf32, #tpu.memory_space<vmem>>, vector<1x128xf32>,
      %cst_15 = arith.constant 0.000000e+00 : f32
      %25 = vector.broadcast %cst_15 : f32 to vector<1x128xf32>
      %c0_16 = arith.constant 0 : index
      %c0_17 = arith.constant 0 : index
      %26 = vector.load %arg5[%c0_16, %c0_17] : memref<1x128xf32, #tpu.memory_space<vmem>>, vector<1x128xf32>
      tpu.vector_store %arg5[%c0_16, %c0_17], %25 {strides = array<i32>} : memref<1x128xf32, #tpu.memory_space<vmem>>, vector<1x128xf32>,
      %c0_i32_18 = arith.constant 0 : i32
      %27 = vector.broadcast %c0_i32_18 : i32 to vector<1x128xi32>
      %c0_19 = arith.constant 0 : index
      %c0_20 = arith.constant 0 : index
      %28 = vector.load %arg6[%c0_19, %c0_20] : memref<1x128xi32, #tpu.memory_space<vmem>>, vector<1x128xi32>
      tpu.vector_store %arg6[%c0_19, %c0_20], %27 {strides = array<i32>} : memref<1x128xi32, #tpu.memory_space<vmem>>, vector<1x128xi32>,
    } else {
    }
    %c0_i32_2 = arith.constant 0 : i32
    %5 = arith.cmpi eq, %arg1, %c0_i32_2 : i32
    %6 = arith.extui %5 : i1 to i32
    %c0_i32_3 = arith.constant 0 : i32
    %7 = arith.cmpi ne, %6, %c0_i32_3 : i32
    scf.if %7 {
      %cst = arith.constant 0.000000e+00 : f32
      %21 = vector.broadcast %cst : f32 to vector<16x128xf32>
      %c0_12 = arith.constant 0 : index
      %c0_13 = arith.constant 0 : index
      %22 = vector.load %arg8[%c0_12, %c0_13] : memref<16x128xf32, #tpu.memory_space<vmem>>, vector<16x128xf32>
      tpu.vector_store %arg8[%c0_12, %c0_13], %21 {strides = array<i32>} : memref<16x128xf32, #tpu.memory_space<vmem>>, vector<16x128xf32>,
      %cst_14 = arith.constant 0.000000e+00 : f32
      %23 = vector.broadcast %cst_14 : f32 to vector<16x128xf32>
      %c0_15 = arith.constant 0 : index
      %c0_16 = arith.constant 0 : index
      %24 = vector.load %arg9[%c0_15, %c0_16] : memref<16x128xf32, #tpu.memory_space<vmem>>, vector<16x128xf32>
      tpu.vector_store %arg9[%c0_15, %c0_16], %23 {strides = array<i32>} : memref<16x128xf32, #tpu.memory_space<vmem>>, vector<16x128xf32>,
    } else {
    }
    %c6_i32 = arith.constant 6 : i32
    %8 = arith.subi %c6_i32, %arg0 : i32
    %c4_i32 = arith.constant 4 : i32
    %9 = arith.muli %8, %c4_i32 : i32
    %c0 = arith.constant 0 : index
    %10 = memref.load %arg7[%c0] : memref<1xi32, #tpu.memory_space<smem>>
    %c0_4 = arith.constant 0 : index
    %c0_5 = arith.constant 0 : index
    %11 = vector.load %arg3[%c0_4, %c0_5] : memref<16x128xi32, #tpu.memory_space<vmem>>, vector<16x128xi32>
    %c6_i32_6 = arith.constant 6 : i32
    %12 = arith.cmpi ne, %arg0, %c6_i32_6 : i32
    %13 = arith.extui %12 : i1 to i32
    %c0_i32_7 = arith.constant 0 : i32
    %14 = arith.cmpi ne, %13, %c0_i32_7 : i32
    scf.if %14 {
      %c0_i32_12 = arith.constant 0 : i32
      %21 = arith.shli %c0_i32_12, %9 : i32
      %22 = arith.addi %10, %21 : i32
      %23 = vector.broadcast %22 : i32 to vector<16x128xi32>
      %24 = arith.cmpi sge, %11, %23 : vector<16x128xi32>
      %cst = arith.constant 1.000000e+00 : f32
      %cst_13 = arith.constant 0.000000e+00 : f32
      %25 = vector.broadcast %cst : f32 to vector<16x128xf32>
      %26 = vector.broadcast %cst_13 : f32 to vector<16x128xf32>
      %27 = arith.select %24, %25, %26 : vector<16x128xi1>, vector<16x128xf32>
      %cst_14 = arith.constant dense<0.000000e+00> : vector<128xf32>
      %28 = vector.multi_reduction <add>, %27, %cst_14 [0] : vector<16x128xf32> to vector<128xf32>
      %29 = vector.shape_cast %28 : vector<128xf32> to vector<1x128xf32>
      %c1_i32 = arith.constant 1 : i32
      %30 = arith.shli %c1_i32, %9 : i32
      %31 = arith.addi %10, %30 : i32
      %32 = vector.broadcast %31 : i32 to vector<16x128xi32>
      %33 = arith.cmpi sge, %11, %32 : vector<16x128xi32>
      %cst_15 = arith.constant 1.000000e+00 : f32
      %cst_16 = arith.constant 0.000000e+00 : f32
      %34 = vector.broadcast %cst_15 : f32 to vector<16x128xf32>
      %35 = vector.broadcast %cst_16 : f32 to vector<16x128xf32>
      %36 = arith.select %33, %34, %35 : vector<16x128xi1>, vector<16x128xf32>
      %cst_17 = arith.constant dense<0.000000e+00> : vector<128xf32>
      %37 = vector.multi_reduction <add>, %36, %cst_17 [0] : vector<16x128xf32> to vector<128xf32>
      %38 = vector.shape_cast %37 : vector<128xf32> to vector<1x128xf32>
      %c2_i32 = arith.constant 2 : i32
      %39 = arith.shli %c2_i32, %9 : i32
      %40 = arith.addi %10, %39 : i32
      %41 = vector.broadcast %40 : i32 to vector<16x128xi32>
      %42 = arith.cmpi sge, %11, %41 : vector<16x128xi32>
      %cst_18 = arith.constant 1.000000e+00 : f32
      %cst_19 = arith.constant 0.000000e+00 : f32
      %43 = vector.broadcast %cst_18 : f32 to vector<16x128xf32>
      %44 = vector.broadcast %cst_19 : f32 to vector<16x128xf32>
      %45 = arith.select %42, %43, %44 : vector<16x128xi1>, vector<16x128xf32>
      %cst_20 = arith.constant dense<0.000000e+00> : vector<128xf32>
      %46 = vector.multi_reduction <add>, %45, %cst_20 [0] : vector<16x128xf32> to vector<128xf32>
      %47 = vector.shape_cast %46 : vector<128xf32> to vector<1x128xf32>
      %c3_i32 = arith.constant 3 : i32
      %48 = arith.shli %c3_i32, %9 : i32
      %49 = arith.addi %10, %48 : i32
      %50 = vector.broadcast %49 : i32 to vector<16x128xi32>
      %51 = arith.cmpi sge, %11, %50 : vector<16x128xi32>
      %cst_21 = arith.constant 1.000000e+00 : f32
      %cst_22 = arith.constant 0.000000e+00 : f32
      %52 = vector.broadcast %cst_21 : f32 to vector<16x128xf32>
      %53 = vector.broadcast %cst_22 : f32 to vector<16x128xf32>
      %54 = arith.select %51, %52, %53 : vector<16x128xi1>, vector<16x128xf32>
      %cst_23 = arith.constant dense<0.000000e+00> : vector<128xf32>
      %55 = vector.multi_reduction <add>, %54, %cst_23 [0] : vector<16x128xf32> to vector<128xf32>
      %56 = vector.shape_cast %55 : vector<128xf32> to vector<1x128xf32>
      %c4_i32_24 = arith.constant 4 : i32
      %57 = arith.shli %c4_i32_24, %9 : i32
      %58 = arith.addi %10, %57 : i32
      %59 = vector.broadcast %58 : i32 to vector<16x128xi32>
      %60 = arith.cmpi sge, %11, %59 : vector<16x128xi32>
      %cst_25 = arith.constant 1.000000e+00 : f32
      %cst_26 = arith.constant 0.000000e+00 : f32
      %61 = vector.broadcast %cst_25 : f32 to vector<16x128xf32>
      %62 = vector.broadcast %cst_26 : f32 to vector<16x128xf32>
      %63 = arith.select %60, %61, %62 : vector<16x128xi1>, vector<16x128xf32>
      %cst_27 = arith.constant dense<0.000000e+00> : vector<128xf32>
      %64 = vector.multi_reduction <add>, %63, %cst_27 [0] : vector<16x128xf32> to vector<128xf32>
      %65 = vector.shape_cast %64 : vector<128xf32> to vector<1x128xf32>
      %c5_i32 = arith.constant 5 : i32
      %66 = arith.shli %c5_i32, %9 : i32
      %67 = arith.addi %10, %66 : i32
      %68 = vector.broadcast %67 : i32 to vector<16x128xi32>
      %69 = arith.cmpi sge, %11, %68 : vector<16x128xi32>
      %cst_28 = arith.constant 1.000000e+00 : f32
      %cst_29 = arith.constant 0.000000e+00 : f32
      %70 = vector.broadcast %cst_28 : f32 to vector<16x128xf32>
      %71 = vector.broadcast %cst_29 : f32 to vector<16x128xf32>
      %72 = arith.select %69, %70, %71 : vector<16x128xi1>, vector<16x128xf32>
      %cst_30 = arith.constant dense<0.000000e+00> : vector<128xf32>
      %73 = vector.multi_reduction <add>, %72, %cst_30 [0] : vector<16x128xf32> to vector<128xf32>
      %74 = vector.shape_cast %73 : vector<128xf32> to vector<1x128xf32>
      %c6_i32_31 = arith.constant 6 : i32
      %75 = arith.shli %c6_i32_31, %9 : i32
      %76 = arith.addi %10, %75 : i32
      %77 = vector.broadcast %76 : i32 to vector<16x128xi32>
      %78 = arith.cmpi sge, %11, %77 : vector<16x128xi32>
      %cst_32 = arith.constant 1.000000e+00 : f32
      %cst_33 = arith.constant 0.000000e+00 : f32
      %79 = vector.broadcast %cst_32 : f32 to vector<16x128xf32>
      %80 = vector.broadcast %cst_33 : f32 to vector<16x128xf32>
      %81 = arith.select %78, %79, %80 : vector<16x128xi1>, vector<16x128xf32>
      %cst_34 = arith.constant dense<0.000000e+00> : vector<128xf32>
      %82 = vector.multi_reduction <add>, %81, %cst_34 [0] : vector<16x128xf32> to vector<128xf32>
      %83 = vector.shape_cast %82 : vector<128xf32> to vector<1x128xf32>
      %c7_i32 = arith.constant 7 : i32
      %84 = arith.shli %c7_i32, %9 : i32
      %85 = arith.addi %10, %84 : i32
      %86 = vector.broadcast %85 : i32 to vector<16x128xi32>
      %87 = arith.cmpi sge, %11, %86 : vector<16x128xi32>
      %cst_35 = arith.constant 1.000000e+00 : f32
      %cst_36 = arith.constant 0.000000e+00 : f32
      %88 = vector.broadcast %cst_35 : f32 to vector<16x128xf32>
      %89 = vector.broadcast %cst_36 : f32 to vector<16x128xf32>
      %90 = arith.select %87, %88, %89 : vector<16x128xi1>, vector<16x128xf32>
      %cst_37 = arith.constant dense<0.000000e+00> : vector<128xf32>
      %91 = vector.multi_reduction <add>, %90, %cst_37 [0] : vector<16x128xf32> to vector<128xf32>
      %92 = vector.shape_cast %91 : vector<128xf32> to vector<1x128xf32>
      %c8_i32 = arith.constant 8 : i32
      %93 = arith.shli %c8_i32, %9 : i32
      %94 = arith.addi %10, %93 : i32
      %95 = vector.broadcast %94 : i32 to vector<16x128xi32>
      %96 = arith.cmpi sge, %11, %95 : vector<16x128xi32>
      %cst_38 = arith.constant 1.000000e+00 : f32
      %cst_39 = arith.constant 0.000000e+00 : f32
      %97 = vector.broadcast %cst_38 : f32 to vector<16x128xf32>
      %98 = vector.broadcast %cst_39 : f32 to vector<16x128xf32>
      %99 = arith.select %96, %97, %98 : vector<16x128xi1>, vector<16x128xf32>
      %cst_40 = arith.constant dense<0.000000e+00> : vector<128xf32>
      %100 = vector.multi_reduction <add>, %99, %cst_40 [0] : vector<16x128xf32> to vector<128xf32>
      %101 = vector.shape_cast %100 : vector<128xf32> to vector<1x128xf32>
      %c9_i32 = arith.constant 9 : i32
      %102 = arith.shli %c9_i32, %9 : i32
      %103 = arith.addi %10, %102 : i32
      %104 = vector.broadcast %103 : i32 to vector<16x128xi32>
      %105 = arith.cmpi sge, %11, %104 : vector<16x128xi32>
      %cst_41 = arith.constant 1.000000e+00 : f32
      %cst_42 = arith.constant 0.000000e+00 : f32
      %106 = vector.broadcast %cst_41 : f32 to vector<16x128xf32>
      %107 = vector.broadcast %cst_42 : f32 to vector<16x128xf32>
      %108 = arith.select %105, %106, %107 : vector<16x128xi1>, vector<16x128xf32>
      %cst_43 = arith.constant dense<0.000000e+00> : vector<128xf32>
      %109 = vector.multi_reduction <add>, %108, %cst_43 [0] : vector<16x128xf32> to vector<128xf32>
      %110 = vector.shape_cast %109 : vector<128xf32> to vector<1x128xf32>
      %c10_i32 = arith.constant 10 : i32
      %111 = arith.shli %c10_i32, %9 : i32
      %112 = arith.addi %10, %111 : i32
      %113 = vector.broadcast %112 : i32 to vector<16x128xi32>
      %114 = arith.cmpi sge, %11, %113 : vector<16x128xi32>
      %cst_44 = arith.constant 1.000000e+00 : f32
      %cst_45 = arith.constant 0.000000e+00 : f32
      %115 = vector.broadcast %cst_44 : f32 to vector<16x128xf32>
      %116 = vector.broadcast %cst_45 : f32 to vector<16x128xf32>
      %117 = arith.select %114, %115, %116 : vector<16x128xi1>, vector<16x128xf32>
      %cst_46 = arith.constant dense<0.000000e+00> : vector<128xf32>
      %118 = vector.multi_reduction <add>, %117, %cst_46 [0] : vector<16x128xf32> to vector<128xf32>
      %119 = vector.shape_cast %118 : vector<128xf32> to vector<1x128xf32>
      %c11_i32 = arith.constant 11 : i32
      %120 = arith.shli %c11_i32, %9 : i32
      %121 = arith.addi %10, %120 : i32
      %122 = vector.broadcast %121 : i32 to vector<16x128xi32>
      %123 = arith.cmpi sge, %11, %122 : vector<16x128xi32>
      %cst_47 = arith.constant 1.000000e+00 : f32
      %cst_48 = arith.constant 0.000000e+00 : f32
      %124 = vector.broadcast %cst_47 : f32 to vector<16x128xf32>
      %125 = vector.broadcast %cst_48 : f32 to vector<16x128xf32>
      %126 = arith.select %123, %124, %125 : vector<16x128xi1>, vector<16x128xf32>
      %cst_49 = arith.constant dense<0.000000e+00> : vector<128xf32>
      %127 = vector.multi_reduction <add>, %126, %cst_49 [0] : vector<16x128xf32> to vector<128xf32>
      %128 = vector.shape_cast %127 : vector<128xf32> to vector<1x128xf32>
      %c12_i32 = arith.constant 12 : i32
      %129 = arith.shli %c12_i32, %9 : i32
      %130 = arith.addi %10, %129 : i32
      %131 = vector.broadcast %130 : i32 to vector<16x128xi32>
      %132 = arith.cmpi sge, %11, %131 : vector<16x128xi32>
      %cst_50 = arith.constant 1.000000e+00 : f32
      %cst_51 = arith.constant 0.000000e+00 : f32
      %133 = vector.broadcast %cst_50 : f32 to vector<16x128xf32>
      %134 = vector.broadcast %cst_51 : f32 to vector<16x128xf32>
      %135 = arith.select %132, %133, %134 : vector<16x128xi1>, vector<16x128xf32>
      %cst_52 = arith.constant dense<0.000000e+00> : vector<128xf32>
      %136 = vector.multi_reduction <add>, %135, %cst_52 [0] : vector<16x128xf32> to vector<128xf32>
      %137 = vector.shape_cast %136 : vector<128xf32> to vector<1x128xf32>
      %c13_i32 = arith.constant 13 : i32
      %138 = arith.shli %c13_i32, %9 : i32
      %139 = arith.addi %10, %138 : i32
      %140 = vector.broadcast %139 : i32 to vector<16x128xi32>
      %141 = arith.cmpi sge, %11, %140 : vector<16x128xi32>
      %cst_53 = arith.constant 1.000000e+00 : f32
      %cst_54 = arith.constant 0.000000e+00 : f32
      %142 = vector.broadcast %cst_53 : f32 to vector<16x128xf32>
      %143 = vector.broadcast %cst_54 : f32 to vector<16x128xf32>
      %144 = arith.select %141, %142, %143 : vector<16x128xi1>, vector<16x128xf32>
      %cst_55 = arith.constant dense<0.000000e+00> : vector<128xf32>
      %145 = vector.multi_reduction <add>, %144, %cst_55 [0] : vector<16x128xf32> to vector<128xf32>
      %146 = vector.shape_cast %145 : vector<128xf32> to vector<1x128xf32>
      %c14_i32 = arith.constant 14 : i32
      %147 = arith.shli %c14_i32, %9 : i32
      %148 = arith.addi %10, %147 : i32
      %149 = vector.broadcast %148 : i32 to vector<16x128xi32>
      %150 = arith.cmpi sge, %11, %149 : vector<16x128xi32>
      %cst_56 = arith.constant 1.000000e+00 : f32
      %cst_57 = arith.constant 0.000000e+00 : f32
      %151 = vector.broadcast %cst_56 : f32 to vector<16x128xf32>
      %152 = vector.broadcast %cst_57 : f32 to vector<16x128xf32>
      %153 = arith.select %150, %151, %152 : vector<16x128xi1>, vector<16x128xf32>
      %cst_58 = arith.constant dense<0.000000e+00> : vector<128xf32>
      %154 = vector.multi_reduction <add>, %153, %cst_58 [0] : vector<16x128xf32> to vector<128xf32>
      %155 = vector.shape_cast %154 : vector<128xf32> to vector<1x128xf32>
      %c15_i32 = arith.constant 15 : i32
      %156 = arith.shli %c15_i32, %9 : i32
      %157 = arith.addi %10, %156 : i32
      %158 = vector.broadcast %157 : i32 to vector<16x128xi32>
      %159 = arith.cmpi sge, %11, %158 : vector<16x128xi32>
      %cst_59 = arith.constant 1.000000e+00 : f32
      %cst_60 = arith.constant 0.000000e+00 : f32
      %160 = vector.broadcast %cst_59 : f32 to vector<16x128xf32>
      %161 = vector.broadcast %cst_60 : f32 to vector<16x128xf32>
      %162 = arith.select %159, %160, %161 : vector<16x128xi1>, vector<16x128xf32>
      %cst_61 = arith.constant dense<0.000000e+00> : vector<128xf32>
      %163 = vector.multi_reduction <add>, %162, %cst_61 [0] : vector<16x128xf32> to vector<128xf32>
      %164 = vector.shape_cast %163 : vector<128xf32> to vector<1x128xf32>
      %c0_62 = arith.constant 0 : index
      %c0_63 = arith.constant 0 : index
      %165 = vector.load %arg8[%c0_62, %c0_63] : memref<16x128xf32, #tpu.memory_space<vmem>>, vector<16x128xf32>
      %166 = tpu.concatenate %29, %38, %47, %56, %65, %74, %83, %92, %101, %110, %119, %128, %137, %146, %155, %164 in 0 : vector<1x128xf32>, vector<1x128xf32>, vector<1x128xf32>, vector<1x128xf32>, vector<1x128xf32>, vector<1x128xf32>, vector<1x128xf32>, vector<1x128xf32>, vector<1x128xf32>, vector<1x128xf32>, vector<1x128xf32>, vector<1x128xf32>, vector<1x128xf32>, vector<1x128xf32>, vector<1x128xf32>, vector<1x128xf32> -> vector<16x128xf32>
      %167 = arith.addf %165, %166 : vector<16x128xf32>
      %c0_64 = arith.constant 0 : index
      %c0_65 = arith.constant 0 : index
      %168 = vector.load %arg8[%c0_64, %c0_65] : memref<16x128xf32, #tpu.memory_space<vmem>>, vector<16x128xf32>
      tpu.vector_store %arg8[%c0_64, %c0_65], %167 {strides = array<i32>} : memref<16x128xf32, #tpu.memory_space<vmem>>, vector<16x128xf32>,
    } else {
    }
    %c6_i32_8 = arith.constant 6 : i32
    %15 = arith.cmpi eq, %arg0, %c6_i32_8 : i32
    %16 = arith.extui %15 : i1 to i32
    %c0_i32_9 = arith.constant 0 : i32
    %17 = arith.cmpi ne, %16, %c0_i32_9 : i32
    scf.if %17 {
      %21 = tpu.bitcast %11 : vector<16x128xi32> -> vector<16x128xf32>
      %c0_i32_12 = arith.constant 0 : i32
      %22 = arith.shli %c0_i32_12, %9 : i32
      %23 = arith.addi %10, %22 : i32
      %24 = vector.broadcast %23 : i32 to vector<16x128xi32>
      %25 = arith.cmpi sge, %11, %24 : vector<16x128xi32>
      %cst = arith.constant 1.000000e+00 : f32
      %cst_13 = arith.constant 0.000000e+00 : f32
      %26 = vector.broadcast %cst : f32 to vector<16x128xf32>
      %27 = vector.broadcast %cst_13 : f32 to vector<16x128xf32>
      %28 = arith.select %25, %26, %27 : vector<16x128xi1>, vector<16x128xf32>
      %cst_14 = arith.constant dense<0.000000e+00> : vector<128xf32>
      %29 = vector.multi_reduction <add>, %28, %cst_14 [0] : vector<16x128xf32> to vector<128xf32>
      %30 = vector.shape_cast %29 : vector<128xf32> to vector<1x128xf32>
      %cst_15 = arith.constant 0.000000e+00 : f32
      %31 = vector.broadcast %cst_15 : f32 to vector<16x128xf32>
      %32 = arith.select %25, %21, %31 : vector<16x128xi1>, vector<16x128xf32>
      %cst_16 = arith.constant dense<0.000000e+00> : vector<128xf32>
      %33 = vector.multi_reduction <add>, %32, %cst_16 [0] : vector<16x128xf32> to vector<128xf32>
      %34 = vector.shape_cast %33 : vector<128xf32> to vector<1x128xf32>
      %c1_i32 = arith.constant 1 : i32
      %35 = arith.shli %c1_i32, %9 : i32
      %36 = arith.addi %10, %35 : i32
      %37 = vector.broadcast %36 : i32 to vector<16x128xi32>
      %38 = arith.cmpi sge, %11, %37 : vector<16x128xi32>
      %cst_17 = arith.constant 1.000000e+00 : f32
      %cst_18 = arith.constant 0.000000e+00 : f32
      %39 = vector.broadcast %cst_17 : f32 to vector<16x128xf32>
      %40 = vector.broadcast %cst_18 : f32 to vector<16x128xf32>
      %41 = arith.select %38, %39, %40 : vector<16x128xi1>, vector<16x128xf32>
      %cst_19 = arith.constant dense<0.000000e+00> : vector<128xf32>
      %42 = vector.multi_reduction <add>, %41, %cst_19 [0] : vector<16x128xf32> to vector<128xf32>
      %43 = vector.shape_cast %42 : vector<128xf32> to vector<1x128xf32>
      %cst_20 = arith.constant 0.000000e+00 : f32
      %44 = vector.broadcast %cst_20 : f32 to vector<16x128xf32>
      %45 = arith.select %38, %21, %44 : vector<16x128xi1>, vector<16x128xf32>
      %cst_21 = arith.constant dense<0.000000e+00> : vector<128xf32>
      %46 = vector.multi_reduction <add>, %45, %cst_21 [0] : vector<16x128xf32> to vector<128xf32>
      %47 = vector.shape_cast %46 : vector<128xf32> to vector<1x128xf32>
      %c2_i32 = arith.constant 2 : i32
      %48 = arith.shli %c2_i32, %9 : i32
      %49 = arith.addi %10, %48 : i32
      %50 = vector.broadcast %49 : i32 to vector<16x128xi32>
      %51 = arith.cmpi sge, %11, %50 : vector<16x128xi32>
      %cst_22 = arith.constant 1.000000e+00 : f32
      %cst_23 = arith.constant 0.000000e+00 : f32
      %52 = vector.broadcast %cst_22 : f32 to vector<16x128xf32>
      %53 = vector.broadcast %cst_23 : f32 to vector<16x128xf32>
      %54 = arith.select %51, %52, %53 : vector<16x128xi1>, vector<16x128xf32>
      %cst_24 = arith.constant dense<0.000000e+00> : vector<128xf32>
      %55 = vector.multi_reduction <add>, %54, %cst_24 [0] : vector<16x128xf32> to vector<128xf32>
      %56 = vector.shape_cast %55 : vector<128xf32> to vector<1x128xf32>
      %cst_25 = arith.constant 0.000000e+00 : f32
      %57 = vector.broadcast %cst_25 : f32 to vector<16x128xf32>
      %58 = arith.select %51, %21, %57 : vector<16x128xi1>, vector<16x128xf32>
      %cst_26 = arith.constant dense<0.000000e+00> : vector<128xf32>
      %59 = vector.multi_reduction <add>, %58, %cst_26 [0] : vector<16x128xf32> to vector<128xf32>
      %60 = vector.shape_cast %59 : vector<128xf32> to vector<1x128xf32>
      %c3_i32 = arith.constant 3 : i32
      %61 = arith.shli %c3_i32, %9 : i32
      %62 = arith.addi %10, %61 : i32
      %63 = vector.broadcast %62 : i32 to vector<16x128xi32>
      %64 = arith.cmpi sge, %11, %63 : vector<16x128xi32>
      %cst_27 = arith.constant 1.000000e+00 : f32
      %cst_28 = arith.constant 0.000000e+00 : f32
      %65 = vector.broadcast %cst_27 : f32 to vector<16x128xf32>
      %66 = vector.broadcast %cst_28 : f32 to vector<16x128xf32>
      %67 = arith.select %64, %65, %66 : vector<16x128xi1>, vector<16x128xf32>
      %cst_29 = arith.constant dense<0.000000e+00> : vector<128xf32>
      %68 = vector.multi_reduction <add>, %67, %cst_29 [0] : vector<16x128xf32> to vector<128xf32>
      %69 = vector.shape_cast %68 : vector<128xf32> to vector<1x128xf32>
      %cst_30 = arith.constant 0.000000e+00 : f32
      %70 = vector.broadcast %cst_30 : f32 to vector<16x128xf32>
      %71 = arith.select %64, %21, %70 : vector<16x128xi1>, vector<16x128xf32>
      %cst_31 = arith.constant dense<0.000000e+00> : vector<128xf32>
      %72 = vector.multi_reduction <add>, %71, %cst_31 [0] : vector<16x128xf32> to vector<128xf32>
      %73 = vector.shape_cast %72 : vector<128xf32> to vector<1x128xf32>
      %c4_i32_32 = arith.constant 4 : i32
      %74 = arith.shli %c4_i32_32, %9 : i32
      %75 = arith.addi %10, %74 : i32
      %76 = vector.broadcast %75 : i32 to vector<16x128xi32>
      %77 = arith.cmpi sge, %11, %76 : vector<16x128xi32>
      %cst_33 = arith.constant 1.000000e+00 : f32
      %cst_34 = arith.constant 0.000000e+00 : f32
      %78 = vector.broadcast %cst_33 : f32 to vector<16x128xf32>
      %79 = vector.broadcast %cst_34 : f32 to vector<16x128xf32>
      %80 = arith.select %77, %78, %79 : vector<16x128xi1>, vector<16x128xf32>
      %cst_35 = arith.constant dense<0.000000e+00> : vector<128xf32>
      %81 = vector.multi_reduction <add>, %80, %cst_35 [0] : vector<16x128xf32> to vector<128xf32>
      %82 = vector.shape_cast %81 : vector<128xf32> to vector<1x128xf32>
      %cst_36 = arith.constant 0.000000e+00 : f32
      %83 = vector.broadcast %cst_36 : f32 to vector<16x128xf32>
      %84 = arith.select %77, %21, %83 : vector<16x128xi1>, vector<16x128xf32>
      %cst_37 = arith.constant dense<0.000000e+00> : vector<128xf32>
      %85 = vector.multi_reduction <add>, %84, %cst_37 [0] : vector<16x128xf32> to vector<128xf32>
      %86 = vector.shape_cast %85 : vector<128xf32> to vector<1x128xf32>
      %c5_i32 = arith.constant 5 : i32
      %87 = arith.shli %c5_i32, %9 : i32
      %88 = arith.addi %10, %87 : i32
      %89 = vector.broadcast %88 : i32 to vector<16x128xi32>
      %90 = arith.cmpi sge, %11, %89 : vector<16x128xi32>
      %cst_38 = arith.constant 1.000000e+00 : f32
      %cst_39 = arith.constant 0.000000e+00 : f32
      %91 = vector.broadcast %cst_38 : f32 to vector<16x128xf32>
      %92 = vector.broadcast %cst_39 : f32 to vector<16x128xf32>
      %93 = arith.select %90, %91, %92 : vector<16x128xi1>, vector<16x128xf32>
      %cst_40 = arith.constant dense<0.000000e+00> : vector<128xf32>
      %94 = vector.multi_reduction <add>, %93, %cst_40 [0] : vector<16x128xf32> to vector<128xf32>
      %95 = vector.shape_cast %94 : vector<128xf32> to vector<1x128xf32>
      %cst_41 = arith.constant 0.000000e+00 : f32
      %96 = vector.broadcast %cst_41 : f32 to vector<16x128xf32>
      %97 = arith.select %90, %21, %96 : vector<16x128xi1>, vector<16x128xf32>
      %cst_42 = arith.constant dense<0.000000e+00> : vector<128xf32>
      %98 = vector.multi_reduction <add>, %97, %cst_42 [0] : vector<16x128xf32> to vector<128xf32>
      %99 = vector.shape_cast %98 : vector<128xf32> to vector<1x128xf32>
      %c6_i32_43 = arith.constant 6 : i32
      %100 = arith.shli %c6_i32_43, %9 : i32
      %101 = arith.addi %10, %100 : i32
      %102 = vector.broadcast %101 : i32 to vector<16x128xi32>
      %103 = arith.cmpi sge, %11, %102 : vector<16x128xi32>
      %cst_44 = arith.constant 1.000000e+00 : f32
      %cst_45 = arith.constant 0.000000e+00 : f32
      %104 = vector.broadcast %cst_44 : f32 to vector<16x128xf32>
      %105 = vector.broadcast %cst_45 : f32 to vector<16x128xf32>
      %106 = arith.select %103, %104, %105 : vector<16x128xi1>, vector<16x128xf32>
      %cst_46 = arith.constant dense<0.000000e+00> : vector<128xf32>
      %107 = vector.multi_reduction <add>, %106, %cst_46 [0] : vector<16x128xf32> to vector<128xf32>
      %108 = vector.shape_cast %107 : vector<128xf32> to vector<1x128xf32>
      %cst_47 = arith.constant 0.000000e+00 : f32
      %109 = vector.broadcast %cst_47 : f32 to vector<16x128xf32>
      %110 = arith.select %103, %21, %109 : vector<16x128xi1>, vector<16x128xf32>
      %cst_48 = arith.constant dense<0.000000e+00> : vector<128xf32>
      %111 = vector.multi_reduction <add>, %110, %cst_48 [0] : vector<16x128xf32> to vector<128xf32>
      %112 = vector.shape_cast %111 : vector<128xf32> to vector<1x128xf32>
      %c7_i32 = arith.constant 7 : i32
      %113 = arith.shli %c7_i32, %9 : i32
      %114 = arith.addi %10, %113 : i32
      %115 = vector.broadcast %114 : i32 to vector<16x128xi32>
      %116 = arith.cmpi sge, %11, %115 : vector<16x128xi32>
      %cst_49 = arith.constant 1.000000e+00 : f32
      %cst_50 = arith.constant 0.000000e+00 : f32
      %117 = vector.broadcast %cst_49 : f32 to vector<16x128xf32>
      %118 = vector.broadcast %cst_50 : f32 to vector<16x128xf32>
      %119 = arith.select %116, %117, %118 : vector<16x128xi1>, vector<16x128xf32>
      %cst_51 = arith.constant dense<0.000000e+00> : vector<128xf32>
      %120 = vector.multi_reduction <add>, %119, %cst_51 [0] : vector<16x128xf32> to vector<128xf32>
      %121 = vector.shape_cast %120 : vector<128xf32> to vector<1x128xf32>
      %cst_52 = arith.constant 0.000000e+00 : f32
      %122 = vector.broadcast %cst_52 : f32 to vector<16x128xf32>
      %123 = arith.select %116, %21, %122 : vector<16x128xi1>, vector<16x128xf32>
      %cst_53 = arith.constant dense<0.000000e+00> : vector<128xf32>
      %124 = vector.multi_reduction <add>, %123, %cst_53 [0] : vector<16x128xf32> to vector<128xf32>
      %125 = vector.shape_cast %124 : vector<128xf32> to vector<1x128xf32>
      %c8_i32 = arith.constant 8 : i32
      %126 = arith.shli %c8_i32, %9 : i32
      %127 = arith.addi %10, %126 : i32
      %128 = vector.broadcast %127 : i32 to vector<16x128xi32>
      %129 = arith.cmpi sge, %11, %128 : vector<16x128xi32>
      %cst_54 = arith.constant 1.000000e+00 : f32
      %cst_55 = arith.constant 0.000000e+00 : f32
      %130 = vector.broadcast %cst_54 : f32 to vector<16x128xf32>
      %131 = vector.broadcast %cst_55 : f32 to vector<16x128xf32>
      %132 = arith.select %129, %130, %131 : vector<16x128xi1>, vector<16x128xf32>
      %cst_56 = arith.constant dense<0.000000e+00> : vector<128xf32>
      %133 = vector.multi_reduction <add>, %132, %cst_56 [0] : vector<16x128xf32> to vector<128xf32>
      %134 = vector.shape_cast %133 : vector<128xf32> to vector<1x128xf32>
      %cst_57 = arith.constant 0.000000e+00 : f32
      %135 = vector.broadcast %cst_57 : f32 to vector<16x128xf32>
      %136 = arith.select %129, %21, %135 : vector<16x128xi1>, vector<16x128xf32>
      %cst_58 = arith.constant dense<0.000000e+00> : vector<128xf32>
      %137 = vector.multi_reduction <add>, %136, %cst_58 [0] : vector<16x128xf32> to vector<128xf32>
      %138 = vector.shape_cast %137 : vector<128xf32> to vector<1x128xf32>
      %c9_i32 = arith.constant 9 : i32
      %139 = arith.shli %c9_i32, %9 : i32
      %140 = arith.addi %10, %139 : i32
      %141 = vector.broadcast %140 : i32 to vector<16x128xi32>
      %142 = arith.cmpi sge, %11, %141 : vector<16x128xi32>
      %cst_59 = arith.constant 1.000000e+00 : f32
      %cst_60 = arith.constant 0.000000e+00 : f32
      %143 = vector.broadcast %cst_59 : f32 to vector<16x128xf32>
      %144 = vector.broadcast %cst_60 : f32 to vector<16x128xf32>
      %145 = arith.select %142, %143, %144 : vector<16x128xi1>, vector<16x128xf32>
      %cst_61 = arith.constant dense<0.000000e+00> : vector<128xf32>
      %146 = vector.multi_reduction <add>, %145, %cst_61 [0] : vector<16x128xf32> to vector<128xf32>
      %147 = vector.shape_cast %146 : vector<128xf32> to vector<1x128xf32>
      %cst_62 = arith.constant 0.000000e+00 : f32
      %148 = vector.broadcast %cst_62 : f32 to vector<16x128xf32>
      %149 = arith.select %142, %21, %148 : vector<16x128xi1>, vector<16x128xf32>
      %cst_63 = arith.constant dense<0.000000e+00> : vector<128xf32>
      %150 = vector.multi_reduction <add>, %149, %cst_63 [0] : vector<16x128xf32> to vector<128xf32>
      %151 = vector.shape_cast %150 : vector<128xf32> to vector<1x128xf32>
      %c10_i32 = arith.constant 10 : i32
      %152 = arith.shli %c10_i32, %9 : i32
      %153 = arith.addi %10, %152 : i32
      %154 = vector.broadcast %153 : i32 to vector<16x128xi32>
      %155 = arith.cmpi sge, %11, %154 : vector<16x128xi32>
      %cst_64 = arith.constant 1.000000e+00 : f32
      %cst_65 = arith.constant 0.000000e+00 : f32
      %156 = vector.broadcast %cst_64 : f32 to vector<16x128xf32>
      %157 = vector.broadcast %cst_65 : f32 to vector<16x128xf32>
      %158 = arith.select %155, %156, %157 : vector<16x128xi1>, vector<16x128xf32>
      %cst_66 = arith.constant dense<0.000000e+00> : vector<128xf32>
      %159 = vector.multi_reduction <add>, %158, %cst_66 [0] : vector<16x128xf32> to vector<128xf32>
      %160 = vector.shape_cast %159 : vector<128xf32> to vector<1x128xf32>
      %cst_67 = arith.constant 0.000000e+00 : f32
      %161 = vector.broadcast %cst_67 : f32 to vector<16x128xf32>
      %162 = arith.select %155, %21, %161 : vector<16x128xi1>, vector<16x128xf32>
      %cst_68 = arith.constant dense<0.000000e+00> : vector<128xf32>
      %163 = vector.multi_reduction <add>, %162, %cst_68 [0] : vector<16x128xf32> to vector<128xf32>
      %164 = vector.shape_cast %163 : vector<128xf32> to vector<1x128xf32>
      %c11_i32 = arith.constant 11 : i32
      %165 = arith.shli %c11_i32, %9 : i32
      %166 = arith.addi %10, %165 : i32
      %167 = vector.broadcast %166 : i32 to vector<16x128xi32>
      %168 = arith.cmpi sge, %11, %167 : vector<16x128xi32>
      %cst_69 = arith.constant 1.000000e+00 : f32
      %cst_70 = arith.constant 0.000000e+00 : f32
      %169 = vector.broadcast %cst_69 : f32 to vector<16x128xf32>
      %170 = vector.broadcast %cst_70 : f32 to vector<16x128xf32>
      %171 = arith.select %168, %169, %170 : vector<16x128xi1>, vector<16x128xf32>
      %cst_71 = arith.constant dense<0.000000e+00> : vector<128xf32>
      %172 = vector.multi_reduction <add>, %171, %cst_71 [0] : vector<16x128xf32> to vector<128xf32>
      %173 = vector.shape_cast %172 : vector<128xf32> to vector<1x128xf32>
      %cst_72 = arith.constant 0.000000e+00 : f32
      %174 = vector.broadcast %cst_72 : f32 to vector<16x128xf32>
      %175 = arith.select %168, %21, %174 : vector<16x128xi1>, vector<16x128xf32>
      %cst_73 = arith.constant dense<0.000000e+00> : vector<128xf32>
      %176 = vector.multi_reduction <add>, %175, %cst_73 [0] : vector<16x128xf32> to vector<128xf32>
      %177 = vector.shape_cast %176 : vector<128xf32> to vector<1x128xf32>
      %c12_i32 = arith.constant 12 : i32
      %178 = arith.shli %c12_i32, %9 : i32
      %179 = arith.addi %10, %178 : i32
      %180 = vector.broadcast %179 : i32 to vector<16x128xi32>
      %181 = arith.cmpi sge, %11, %180 : vector<16x128xi32>
      %cst_74 = arith.constant 1.000000e+00 : f32
      %cst_75 = arith.constant 0.000000e+00 : f32
      %182 = vector.broadcast %cst_74 : f32 to vector<16x128xf32>
      %183 = vector.broadcast %cst_75 : f32 to vector<16x128xf32>
      %184 = arith.select %181, %182, %183 : vector<16x128xi1>, vector<16x128xf32>
      %cst_76 = arith.constant dense<0.000000e+00> : vector<128xf32>
      %185 = vector.multi_reduction <add>, %184, %cst_76 [0] : vector<16x128xf32> to vector<128xf32>
      %186 = vector.shape_cast %185 : vector<128xf32> to vector<1x128xf32>
      %cst_77 = arith.constant 0.000000e+00 : f32
      %187 = vector.broadcast %cst_77 : f32 to vector<16x128xf32>
      %188 = arith.select %181, %21, %187 : vector<16x128xi1>, vector<16x128xf32>
      %cst_78 = arith.constant dense<0.000000e+00> : vector<128xf32>
      %189 = vector.multi_reduction <add>, %188, %cst_78 [0] : vector<16x128xf32> to vector<128xf32>
      %190 = vector.shape_cast %189 : vector<128xf32> to vector<1x128xf32>
      %c13_i32 = arith.constant 13 : i32
      %191 = arith.shli %c13_i32, %9 : i32
      %192 = arith.addi %10, %191 : i32
      %193 = vector.broadcast %192 : i32 to vector<16x128xi32>
      %194 = arith.cmpi sge, %11, %193 : vector<16x128xi32>
      %cst_79 = arith.constant 1.000000e+00 : f32
      %cst_80 = arith.constant 0.000000e+00 : f32
      %195 = vector.broadcast %cst_79 : f32 to vector<16x128xf32>
      %196 = vector.broadcast %cst_80 : f32 to vector<16x128xf32>
      %197 = arith.select %194, %195, %196 : vector<16x128xi1>, vector<16x128xf32>
      %cst_81 = arith.constant dense<0.000000e+00> : vector<128xf32>
      %198 = vector.multi_reduction <add>, %197, %cst_81 [0] : vector<16x128xf32> to vector<128xf32>
      %199 = vector.shape_cast %198 : vector<128xf32> to vector<1x128xf32>
      %cst_82 = arith.constant 0.000000e+00 : f32
      %200 = vector.broadcast %cst_82 : f32 to vector<16x128xf32>
      %201 = arith.select %194, %21, %200 : vector<16x128xi1>, vector<16x128xf32>
      %cst_83 = arith.constant dense<0.000000e+00> : vector<128xf32>
      %202 = vector.multi_reduction <add>, %201, %cst_83 [0] : vector<16x128xf32> to vector<128xf32>
      %203 = vector.shape_cast %202 : vector<128xf32> to vector<1x128xf32>
      %c14_i32 = arith.constant 14 : i32
      %204 = arith.shli %c14_i32, %9 : i32
      %205 = arith.addi %10, %204 : i32
      %206 = vector.broadcast %205 : i32 to vector<16x128xi32>
      %207 = arith.cmpi sge, %11, %206 : vector<16x128xi32>
      %cst_84 = arith.constant 1.000000e+00 : f32
      %cst_85 = arith.constant 0.000000e+00 : f32
      %208 = vector.broadcast %cst_84 : f32 to vector<16x128xf32>
      %209 = vector.broadcast %cst_85 : f32 to vector<16x128xf32>
      %210 = arith.select %207, %208, %209 : vector<16x128xi1>, vector<16x128xf32>
      %cst_86 = arith.constant dense<0.000000e+00> : vector<128xf32>
      %211 = vector.multi_reduction <add>, %210, %cst_86 [0] : vector<16x128xf32> to vector<128xf32>
      %212 = vector.shape_cast %211 : vector<128xf32> to vector<1x128xf32>
      %cst_87 = arith.constant 0.000000e+00 : f32
      %213 = vector.broadcast %cst_87 : f32 to vector<16x128xf32>
      %214 = arith.select %207, %21, %213 : vector<16x128xi1>, vector<16x128xf32>
      %cst_88 = arith.constant dense<0.000000e+00> : vector<128xf32>
      %215 = vector.multi_reduction <add>, %214, %cst_88 [0] : vector<16x128xf32> to vector<128xf32>
      %216 = vector.shape_cast %215 : vector<128xf32> to vector<1x128xf32>
      %c15_i32 = arith.constant 15 : i32
      %217 = arith.shli %c15_i32, %9 : i32
      %218 = arith.addi %10, %217 : i32
      %219 = vector.broadcast %218 : i32 to vector<16x128xi32>
      %220 = arith.cmpi sge, %11, %219 : vector<16x128xi32>
      %cst_89 = arith.constant 1.000000e+00 : f32
      %cst_90 = arith.constant 0.000000e+00 : f32
      %221 = vector.broadcast %cst_89 : f32 to vector<16x128xf32>
      %222 = vector.broadcast %cst_90 : f32 to vector<16x128xf32>
      %223 = arith.select %220, %221, %222 : vector<16x128xi1>, vector<16x128xf32>
      %cst_91 = arith.constant dense<0.000000e+00> : vector<128xf32>
      %224 = vector.multi_reduction <add>, %223, %cst_91 [0] : vector<16x128xf32> to vector<128xf32>
      %225 = vector.shape_cast %224 : vector<128xf32> to vector<1x128xf32>
      %cst_92 = arith.constant 0.000000e+00 : f32
      %226 = vector.broadcast %cst_92 : f32 to vector<16x128xf32>
      %227 = arith.select %220, %21, %226 : vector<16x128xi1>, vector<16x128xf32>
      %cst_93 = arith.constant dense<0.000000e+00> : vector<128xf32>
      %228 = vector.multi_reduction <add>, %227, %cst_93 [0] : vector<16x128xf32> to vector<128xf32>
      %229 = vector.shape_cast %228 : vector<128xf32> to vector<1x128xf32>
      %c0_94 = arith.constant 0 : index
      %c0_95 = arith.constant 0 : index
      %230 = vector.load %arg8[%c0_94, %c0_95] : memref<16x128xf32, #tpu.memory_space<vmem>>, vector<16x128xf32>
      %231 = tpu.concatenate %30, %43, %56, %69, %82, %95, %108, %121, %134, %147, %160, %173, %186, %199, %212, %225 in 0 : vector<1x128xf32>, vector<1x128xf32>, vector<1x128xf32>, vector<1x128xf32>, vector<1x128xf32>, vector<1x128xf32>, vector<1x128xf32>, vector<1x128xf32>, vector<1x128xf32>, vector<1x128xf32>, vector<1x128xf32>, vector<1x128xf32>, vector<1x128xf32>, vector<1x128xf32>, vector<1x128xf32>, vector<1x128xf32> -> vector<16x128xf32>
      %232 = arith.addf %230, %231 : vector<16x128xf32>
      %c0_96 = arith.constant 0 : index
      %c0_97 = arith.constant 0 : index
      %233 = vector.load %arg8[%c0_96, %c0_97] : memref<16x128xf32, #tpu.memory_space<vmem>>, vector<16x128xf32>
      tpu.vector_store %arg8[%c0_96, %c0_97], %232 {strides = array<i32>} : memref<16x128xf32, #tpu.memory_space<vmem>>, vector<16x128xf32>,
      %c0_98 = arith.constant 0 : index
      %c0_99 = arith.constant 0 : index
      %234 = vector.load %arg9[%c0_98, %c0_99] : memref<16x128xf32, #tpu.memory_space<vmem>>, vector<16x128xf32>
      %235 = tpu.concatenate %34, %47, %60, %73, %86, %99, %112, %125, %138, %151, %164, %177, %190, %203, %216, %229 in 0 : vector<1x128xf32>, vector<1x128xf32>, vector<1x128xf32>, vector<1x128xf32>, vector<1x128xf32>, vector<1x128xf32>, vector<1x128xf32>, vector<1x128xf32>, vector<1x128xf32>, vector<1x128xf32>, vector<1x128xf32>, vector<1x128xf32>, vector<1x128xf32>, vector<1x128xf32>, vector<1x128xf32>, vector<1x128xf32> -> vector<16x128xf32>
      %236 = arith.addf %234, %235 : vector<16x128xf32>
      %c0_100 = arith.constant 0 : index
      %c0_101 = arith.constant 0 : index
      %237 = vector.load %arg9[%c0_100, %c0_101] : memref<16x128xf32, #tpu.memory_space<vmem>>, vector<16x128xf32>
      tpu.vector_store %arg9[%c0_100, %c0_101], %236 {strides = array<i32>} : memref<16x128xf32, #tpu.memory_space<vmem>>, vector<16x128xf32>,
    } else {
    }
    %c0_i32_10 = arith.constant 0 : i32
    %18 = arith.cmpi eq, %arg1, %c0_i32_10 : i32
    %19 = arith.extui %18 : i1 to i32
    %c0_i32_11 = arith.constant 0 : i32
    %20 = arith.cmpi ne, %19, %c0_i32_11 : i32
    scf.if %20 {
      %c0_12 = arith.constant 0 : index
      %21 = memref.load %arg2[%c0_12] : memref<2xi32, #tpu.memory_space<smem>>
      %22 = arith.sitofp %21 : i32 to f32
      %c0_13 = arith.constant 0 : index
      %c0_14 = arith.constant 0 : index
      %23 = vector.load %arg8[%c0_13, %c0_14] : memref<16x128xf32, #tpu.memory_space<vmem>>, vector<1x128xf32>
      %24 = vector.shape_cast %23 : vector<1x128xf32> to vector<1x1x128xf32>
      %cst = arith.constant dense<0.000000e+00> : vector<1xf32>
      %25 = vector.multi_reduction <add>, %24, %cst [1, 2] : vector<1x1x128xf32> to vector<1xf32>
      %26 = vector.shape_cast %25 : vector<1xf32> to vector<1x1x1xf32>
      %27 = vector.extract %26[0, 0, 0] : f32 from vector<1x1x1xf32>
      %c0_15 = arith.constant 0 : index
      %c0_16 = arith.constant 0 : index
      %28 = vector.load %arg9[%c0_15, %c0_16] : memref<16x128xf32, #tpu.memory_space<vmem>>, vector<1x128xf32>
      %29 = vector.shape_cast %28 : vector<1x128xf32> to vector<1x1x128xf32>
      %cst_17 = arith.constant dense<0.000000e+00> : vector<1xf32>
      %30 = vector.multi_reduction <add>, %29, %cst_17 [1, 2] : vector<1x1x128xf32> to vector<1xf32>
      %31 = vector.shape_cast %30 : vector<1xf32> to vector<1x1x1xf32>
      %32 = vector.extract %31[0, 0, 0] : f32 from vector<1x1x1xf32>
      %c1 = arith.constant 1 : index
      %c0_18 = arith.constant 0 : index
      %33 = vector.load %arg8[%c1, %c0_18] : memref<16x128xf32, #tpu.memory_space<vmem>>, vector<1x128xf32>
      %34 = vector.shape_cast %33 : vector<1x128xf32> to vector<1x1x128xf32>
      %cst_19 = arith.constant dense<0.000000e+00> : vector<1xf32>
      %35 = vector.multi_reduction <add>, %34, %cst_19 [1, 2] : vector<1x1x128xf32> to vector<1xf32>
      %36 = vector.shape_cast %35 : vector<1xf32> to vector<1x1x1xf32>
      %37 = vector.extract %36[0, 0, 0] : f32 from vector<1x1x1xf32>
      %c1_20 = arith.constant 1 : index
      %c0_21 = arith.constant 0 : index
      %38 = vector.load %arg9[%c1_20, %c0_21] : memref<16x128xf32, #tpu.memory_space<vmem>>, vector<1x128xf32>
      %39 = vector.shape_cast %38 : vector<1x128xf32> to vector<1x1x128xf32>
      %cst_22 = arith.constant dense<0.000000e+00> : vector<1xf32>
      %40 = vector.multi_reduction <add>, %39, %cst_22 [1, 2] : vector<1x1x128xf32> to vector<1xf32>
      %41 = vector.shape_cast %40 : vector<1xf32> to vector<1x1x1xf32>
      %42 = vector.extract %41[0, 0, 0] : f32 from vector<1x1x1xf32>
      %43 = arith.cmpf oge, %37, %22 : f32
      %c1_i32 = arith.constant 1 : i32
      %c0_i32_23 = arith.constant 0 : i32
      %44 = arith.select %43, %c1_i32, %c0_i32_23 : i32
      %45 = arith.select %43, %37, %27 : f32
      %46 = arith.select %43, %42, %32 : f32
      %c2 = arith.constant 2 : index
      %c0_24 = arith.constant 0 : index
      %47 = vector.load %arg8[%c2, %c0_24] : memref<16x128xf32, #tpu.memory_space<vmem>>, vector<1x128xf32>
      %48 = vector.shape_cast %47 : vector<1x128xf32> to vector<1x1x128xf32>
      %cst_25 = arith.constant dense<0.000000e+00> : vector<1xf32>
      %49 = vector.multi_reduction <add>, %48, %cst_25 [1, 2] : vector<1x1x128xf32> to vector<1xf32>
      %50 = vector.shape_cast %49 : vector<1xf32> to vector<1x1x1xf32>
      %51 = vector.extract %50[0, 0, 0] : f32 from vector<1x1x1xf32>
      %c2_26 = arith.constant 2 : index
      %c0_27 = arith.constant 0 : index
      %52 = vector.load %arg9[%c2_26, %c0_27] : memref<16x128xf32, #tpu.memory_space<vmem>>, vector<1x128xf32>
      %53 = vector.shape_cast %52 : vector<1x128xf32> to vector<1x1x128xf32>
      %cst_28 = arith.constant dense<0.000000e+00> : vector<1xf32>
      %54 = vector.multi_reduction <add>, %53, %cst_28 [1, 2] : vector<1x1x128xf32> to vector<1xf32>
      %55 = vector.shape_cast %54 : vector<1xf32> to vector<1x1x1xf32>
      %56 = vector.extract %55[0, 0, 0] : f32 from vector<1x1x1xf32>
      %57 = arith.cmpf oge, %51, %22 : f32
      %c2_i32 = arith.constant 2 : i32
      %58 = arith.select %57, %c2_i32, %44 : i32
      %59 = arith.select %57, %51, %45 : f32
      %60 = arith.select %57, %56, %46 : f32
      %c3 = arith.constant 3 : index
      %c0_29 = arith.constant 0 : index
      %61 = vector.load %arg8[%c3, %c0_29] : memref<16x128xf32, #tpu.memory_space<vmem>>, vector<1x128xf32>
      %62 = vector.shape_cast %61 : vector<1x128xf32> to vector<1x1x128xf32>
      %cst_30 = arith.constant dense<0.000000e+00> : vector<1xf32>
      %63 = vector.multi_reduction <add>, %62, %cst_30 [1, 2] : vector<1x1x128xf32> to vector<1xf32>
      %64 = vector.shape_cast %63 : vector<1xf32> to vector<1x1x1xf32>
      %65 = vector.extract %64[0, 0, 0] : f32 from vector<1x1x1xf32>
      %c3_31 = arith.constant 3 : index
      %c0_32 = arith.constant 0 : index
      %66 = vector.load %arg9[%c3_31, %c0_32] : memref<16x128xf32, #tpu.memory_space<vmem>>, vector<1x128xf32>
      %67 = vector.shape_cast %66 : vector<1x128xf32> to vector<1x1x128xf32>
      %cst_33 = arith.constant dense<0.000000e+00> : vector<1xf32>
      %68 = vector.multi_reduction <add>, %67, %cst_33 [1, 2] : vector<1x1x128xf32> to vector<1xf32>
      %69 = vector.shape_cast %68 : vector<1xf32> to vector<1x1x1xf32>
      %70 = vector.extract %69[0, 0, 0] : f32 from vector<1x1x1xf32>
      %71 = arith.cmpf oge, %65, %22 : f32
      %c3_i32 = arith.constant 3 : i32
      %72 = arith.select %71, %c3_i32, %58 : i32
      %73 = arith.select %71, %65, %59 : f32
      %74 = arith.select %71, %70, %60 : f32
      %c4 = arith.constant 4 : index
      %c0_34 = arith.constant 0 : index
      %75 = vector.load %arg8[%c4, %c0_34] : memref<16x128xf32, #tpu.memory_space<vmem>>, vector<1x128xf32>
      %76 = vector.shape_cast %75 : vector<1x128xf32> to vector<1x1x128xf32>
      %cst_35 = arith.constant dense<0.000000e+00> : vector<1xf32>
      %77 = vector.multi_reduction <add>, %76, %cst_35 [1, 2] : vector<1x1x128xf32> to vector<1xf32>
      %78 = vector.shape_cast %77 : vector<1xf32> to vector<1x1x1xf32>
      %79 = vector.extract %78[0, 0, 0] : f32 from vector<1x1x1xf32>
      %c4_36 = arith.constant 4 : index
      %c0_37 = arith.constant 0 : index
      %80 = vector.load %arg9[%c4_36, %c0_37] : memref<16x128xf32, #tpu.memory_space<vmem>>, vector<1x128xf32>
      %81 = vector.shape_cast %80 : vector<1x128xf32> to vector<1x1x128xf32>
      %cst_38 = arith.constant dense<0.000000e+00> : vector<1xf32>
      %82 = vector.multi_reduction <add>, %81, %cst_38 [1, 2] : vector<1x1x128xf32> to vector<1xf32>
      %83 = vector.shape_cast %82 : vector<1xf32> to vector<1x1x1xf32>
      %84 = vector.extract %83[0, 0, 0] : f32 from vector<1x1x1xf32>
      %85 = arith.cmpf oge, %79, %22 : f32
      %c4_i32_39 = arith.constant 4 : i32
      %86 = arith.select %85, %c4_i32_39, %72 : i32
      %87 = arith.select %85, %79, %73 : f32
      %88 = arith.select %85, %84, %74 : f32
      %c5 = arith.constant 5 : index
      %c0_40 = arith.constant 0 : index
      %89 = vector.load %arg8[%c5, %c0_40] : memref<16x128xf32, #tpu.memory_space<vmem>>, vector<1x128xf32>
      %90 = vector.shape_cast %89 : vector<1x128xf32> to vector<1x1x128xf32>
      %cst_41 = arith.constant dense<0.000000e+00> : vector<1xf32>
      %91 = vector.multi_reduction <add>, %90, %cst_41 [1, 2] : vector<1x1x128xf32> to vector<1xf32>
      %92 = vector.shape_cast %91 : vector<1xf32> to vector<1x1x1xf32>
      %93 = vector.extract %92[0, 0, 0] : f32 from vector<1x1x1xf32>
      %c5_42 = arith.constant 5 : index
      %c0_43 = arith.constant 0 : index
      %94 = vector.load %arg9[%c5_42, %c0_43] : memref<16x128xf32, #tpu.memory_space<vmem>>, vector<1x128xf32>
      %95 = vector.shape_cast %94 : vector<1x128xf32> to vector<1x1x128xf32>
      %cst_44 = arith.constant dense<0.000000e+00> : vector<1xf32>
      %96 = vector.multi_reduction <add>, %95, %cst_44 [1, 2] : vector<1x1x128xf32> to vector<1xf32>
      %97 = vector.shape_cast %96 : vector<1xf32> to vector<1x1x1xf32>
      %98 = vector.extract %97[0, 0, 0] : f32 from vector<1x1x1xf32>
      %99 = arith.cmpf oge, %93, %22 : f32
      %c5_i32 = arith.constant 5 : i32
      %100 = arith.select %99, %c5_i32, %86 : i32
      %101 = arith.select %99, %93, %87 : f32
      %102 = arith.select %99, %98, %88 : f32
      %c6 = arith.constant 6 : index
      %c0_45 = arith.constant 0 : index
      %103 = vector.load %arg8[%c6, %c0_45] : memref<16x128xf32, #tpu.memory_space<vmem>>, vector<1x128xf32>
      %104 = vector.shape_cast %103 : vector<1x128xf32> to vector<1x1x128xf32>
      %cst_46 = arith.constant dense<0.000000e+00> : vector<1xf32>
      %105 = vector.multi_reduction <add>, %104, %cst_46 [1, 2] : vector<1x1x128xf32> to vector<1xf32>
      %106 = vector.shape_cast %105 : vector<1xf32> to vector<1x1x1xf32>
      %107 = vector.extract %106[0, 0, 0] : f32 from vector<1x1x1xf32>
      %c6_47 = arith.constant 6 : index
      %c0_48 = arith.constant 0 : index
      %108 = vector.load %arg9[%c6_47, %c0_48] : memref<16x128xf32, #tpu.memory_space<vmem>>, vector<1x128xf32>
      %109 = vector.shape_cast %108 : vector<1x128xf32> to vector<1x1x128xf32>
      %cst_49 = arith.constant dense<0.000000e+00> : vector<1xf32>
      %110 = vector.multi_reduction <add>, %109, %cst_49 [1, 2] : vector<1x1x128xf32> to vector<1xf32>
      %111 = vector.shape_cast %110 : vector<1xf32> to vector<1x1x1xf32>
      %112 = vector.extract %111[0, 0, 0] : f32 from vector<1x1x1xf32>
      %113 = arith.cmpf oge, %107, %22 : f32
      %c6_i32_50 = arith.constant 6 : i32
      %114 = arith.select %113, %c6_i32_50, %100 : i32
      %115 = arith.select %113, %107, %101 : f32
      %116 = arith.select %113, %112, %102 : f32
      %c7 = arith.constant 7 : index
      %c0_51 = arith.constant 0 : index
      %117 = vector.load %arg8[%c7, %c0_51] : memref<16x128xf32, #tpu.memory_space<vmem>>, vector<1x128xf32>
      %118 = vector.shape_cast %117 : vector<1x128xf32> to vector<1x1x128xf32>
      %cst_52 = arith.constant dense<0.000000e+00> : vector<1xf32>
      %119 = vector.multi_reduction <add>, %118, %cst_52 [1, 2] : vector<1x1x128xf32> to vector<1xf32>
      %120 = vector.shape_cast %119 : vector<1xf32> to vector<1x1x1xf32>
      %121 = vector.extract %120[0, 0, 0] : f32 from vector<1x1x1xf32>
      %c7_53 = arith.constant 7 : index
      %c0_54 = arith.constant 0 : index
      %122 = vector.load %arg9[%c7_53, %c0_54] : memref<16x128xf32, #tpu.memory_space<vmem>>, vector<1x128xf32>
      %123 = vector.shape_cast %122 : vector<1x128xf32> to vector<1x1x128xf32>
      %cst_55 = arith.constant dense<0.000000e+00> : vector<1xf32>
      %124 = vector.multi_reduction <add>, %123, %cst_55 [1, 2] : vector<1x1x128xf32> to vector<1xf32>
      %125 = vector.shape_cast %124 : vector<1xf32> to vector<1x1x1xf32>
      %126 = vector.extract %125[0, 0, 0] : f32 from vector<1x1x1xf32>
      %127 = arith.cmpf oge, %121, %22 : f32
      %c7_i32 = arith.constant 7 : i32
      %128 = arith.select %127, %c7_i32, %114 : i32
      %129 = arith.select %127, %121, %115 : f32
      %130 = arith.select %127, %126, %116 : f32
      %c8 = arith.constant 8 : index
      %c0_56 = arith.constant 0 : index
      %131 = vector.load %arg8[%c8, %c0_56] : memref<16x128xf32, #tpu.memory_space<vmem>>, vector<1x128xf32>
      %132 = vector.shape_cast %131 : vector<1x128xf32> to vector<1x1x128xf32>
      %cst_57 = arith.constant dense<0.000000e+00> : vector<1xf32>
      %133 = vector.multi_reduction <add>, %132, %cst_57 [1, 2] : vector<1x1x128xf32> to vector<1xf32>
      %134 = vector.shape_cast %133 : vector<1xf32> to vector<1x1x1xf32>
      %135 = vector.extract %134[0, 0, 0] : f32 from vector<1x1x1xf32>
      %c8_58 = arith.constant 8 : index
      %c0_59 = arith.constant 0 : index
      %136 = vector.load %arg9[%c8_58, %c0_59] : memref<16x128xf32, #tpu.memory_space<vmem>>, vector<1x128xf32>
      %137 = vector.shape_cast %136 : vector<1x128xf32> to vector<1x1x128xf32>
      %cst_60 = arith.constant dense<0.000000e+00> : vector<1xf32>
      %138 = vector.multi_reduction <add>, %137, %cst_60 [1, 2] : vector<1x1x128xf32> to vector<1xf32>
      %139 = vector.shape_cast %138 : vector<1xf32> to vector<1x1x1xf32>
      %140 = vector.extract %139[0, 0, 0] : f32 from vector<1x1x1xf32>
      %141 = arith.cmpf oge, %135, %22 : f32
      %c8_i32 = arith.constant 8 : i32
      %142 = arith.select %141, %c8_i32, %128 : i32
      %143 = arith.select %141, %135, %129 : f32
      %144 = arith.select %141, %140, %130 : f32
      %c9 = arith.constant 9 : index
      %c0_61 = arith.constant 0 : index
      %145 = vector.load %arg8[%c9, %c0_61] : memref<16x128xf32, #tpu.memory_space<vmem>>, vector<1x128xf32>
      %146 = vector.shape_cast %145 : vector<1x128xf32> to vector<1x1x128xf32>
      %cst_62 = arith.constant dense<0.000000e+00> : vector<1xf32>
      %147 = vector.multi_reduction <add>, %146, %cst_62 [1, 2] : vector<1x1x128xf32> to vector<1xf32>
      %148 = vector.shape_cast %147 : vector<1xf32> to vector<1x1x1xf32>
      %149 = vector.extract %148[0, 0, 0] : f32 from vector<1x1x1xf32>
      %c9_63 = arith.constant 9 : index
      %c0_64 = arith.constant 0 : index
      %150 = vector.load %arg9[%c9_63, %c0_64] : memref<16x128xf32, #tpu.memory_space<vmem>>, vector<1x128xf32>
      %151 = vector.shape_cast %150 : vector<1x128xf32> to vector<1x1x128xf32>
      %cst_65 = arith.constant dense<0.000000e+00> : vector<1xf32>
      %152 = vector.multi_reduction <add>, %151, %cst_65 [1, 2] : vector<1x1x128xf32> to vector<1xf32>
      %153 = vector.shape_cast %152 : vector<1xf32> to vector<1x1x1xf32>
      %154 = vector.extract %153[0, 0, 0] : f32 from vector<1x1x1xf32>
      %155 = arith.cmpf oge, %149, %22 : f32
      %c9_i32 = arith.constant 9 : i32
      %156 = arith.select %155, %c9_i32, %142 : i32
      %157 = arith.select %155, %149, %143 : f32
      %158 = arith.select %155, %154, %144 : f32
      %c10 = arith.constant 10 : index
      %c0_66 = arith.constant 0 : index
      %159 = vector.load %arg8[%c10, %c0_66] : memref<16x128xf32, #tpu.memory_space<vmem>>, vector<1x128xf32>
      %160 = vector.shape_cast %159 : vector<1x128xf32> to vector<1x1x128xf32>
      %cst_67 = arith.constant dense<0.000000e+00> : vector<1xf32>
      %161 = vector.multi_reduction <add>, %160, %cst_67 [1, 2] : vector<1x1x128xf32> to vector<1xf32>
      %162 = vector.shape_cast %161 : vector<1xf32> to vector<1x1x1xf32>
      %163 = vector.extract %162[0, 0, 0] : f32 from vector<1x1x1xf32>
      %c10_68 = arith.constant 10 : index
      %c0_69 = arith.constant 0 : index
      %164 = vector.load %arg9[%c10_68, %c0_69] : memref<16x128xf32, #tpu.memory_space<vmem>>, vector<1x128xf32>
      %165 = vector.shape_cast %164 : vector<1x128xf32> to vector<1x1x128xf32>
      %cst_70 = arith.constant dense<0.000000e+00> : vector<1xf32>
      %166 = vector.multi_reduction <add>, %165, %cst_70 [1, 2] : vector<1x1x128xf32> to vector<1xf32>
      %167 = vector.shape_cast %166 : vector<1xf32> to vector<1x1x1xf32>
      %168 = vector.extract %167[0, 0, 0] : f32 from vector<1x1x1xf32>
      %169 = arith.cmpf oge, %163, %22 : f32
      %c10_i32 = arith.constant 10 : i32
      %170 = arith.select %169, %c10_i32, %156 : i32
      %171 = arith.select %169, %163, %157 : f32
      %172 = arith.select %169, %168, %158 : f32
      %c11 = arith.constant 11 : index
      %c0_71 = arith.constant 0 : index
      %173 = vector.load %arg8[%c11, %c0_71] : memref<16x128xf32, #tpu.memory_space<vmem>>, vector<1x128xf32>
      %174 = vector.shape_cast %173 : vector<1x128xf32> to vector<1x1x128xf32>
      %cst_72 = arith.constant dense<0.000000e+00> : vector<1xf32>
      %175 = vector.multi_reduction <add>, %174, %cst_72 [1, 2] : vector<1x1x128xf32> to vector<1xf32>
      %176 = vector.shape_cast %175 : vector<1xf32> to vector<1x1x1xf32>
      %177 = vector.extract %176[0, 0, 0] : f32 from vector<1x1x1xf32>
      %c11_73 = arith.constant 11 : index
      %c0_74 = arith.constant 0 : index
      %178 = vector.load %arg9[%c11_73, %c0_74] : memref<16x128xf32, #tpu.memory_space<vmem>>, vector<1x128xf32>
      %179 = vector.shape_cast %178 : vector<1x128xf32> to vector<1x1x128xf32>
      %cst_75 = arith.constant dense<0.000000e+00> : vector<1xf32>
      %180 = vector.multi_reduction <add>, %179, %cst_75 [1, 2] : vector<1x1x128xf32> to vector<1xf32>
      %181 = vector.shape_cast %180 : vector<1xf32> to vector<1x1x1xf32>
      %182 = vector.extract %181[0, 0, 0] : f32 from vector<1x1x1xf32>
      %183 = arith.cmpf oge, %177, %22 : f32
      %c11_i32 = arith.constant 11 : i32
      %184 = arith.select %183, %c11_i32, %170 : i32
      %185 = arith.select %183, %177, %171 : f32
      %186 = arith.select %183, %182, %172 : f32
      %c12 = arith.constant 12 : index
      %c0_76 = arith.constant 0 : index
      %187 = vector.load %arg8[%c12, %c0_76] : memref<16x128xf32, #tpu.memory_space<vmem>>, vector<1x128xf32>
      %188 = vector.shape_cast %187 : vector<1x128xf32> to vector<1x1x128xf32>
      %cst_77 = arith.constant dense<0.000000e+00> : vector<1xf32>
      %189 = vector.multi_reduction <add>, %188, %cst_77 [1, 2] : vector<1x1x128xf32> to vector<1xf32>
      %190 = vector.shape_cast %189 : vector<1xf32> to vector<1x1x1xf32>
      %191 = vector.extract %190[0, 0, 0] : f32 from vector<1x1x1xf32>
      %c12_78 = arith.constant 12 : index
      %c0_79 = arith.constant 0 : index
      %192 = vector.load %arg9[%c12_78, %c0_79] : memref<16x128xf32, #tpu.memory_space<vmem>>, vector<1x128xf32>
      %193 = vector.shape_cast %192 : vector<1x128xf32> to vector<1x1x128xf32>
      %cst_80 = arith.constant dense<0.000000e+00> : vector<1xf32>
      %194 = vector.multi_reduction <add>, %193, %cst_80 [1, 2] : vector<1x1x128xf32> to vector<1xf32>
      %195 = vector.shape_cast %194 : vector<1xf32> to vector<1x1x1xf32>
      %196 = vector.extract %195[0, 0, 0] : f32 from vector<1x1x1xf32>
      %197 = arith.cmpf oge, %191, %22 : f32
      %c12_i32 = arith.constant 12 : i32
      %198 = arith.select %197, %c12_i32, %184 : i32
      %199 = arith.select %197, %191, %185 : f32
      %200 = arith.select %197, %196, %186 : f32
      %c13 = arith.constant 13 : index
      %c0_81 = arith.constant 0 : index
      %201 = vector.load %arg8[%c13, %c0_81] : memref<16x128xf32, #tpu.memory_space<vmem>>, vector<1x128xf32>
      %202 = vector.shape_cast %201 : vector<1x128xf32> to vector<1x1x128xf32>
      %cst_82 = arith.constant dense<0.000000e+00> : vector<1xf32>
      %203 = vector.multi_reduction <add>, %202, %cst_82 [1, 2] : vector<1x1x128xf32> to vector<1xf32>
      %204 = vector.shape_cast %203 : vector<1xf32> to vector<1x1x1xf32>
      %205 = vector.extract %204[0, 0, 0] : f32 from vector<1x1x1xf32>
      %c13_83 = arith.constant 13 : index
      %c0_84 = arith.constant 0 : index
      %206 = vector.load %arg9[%c13_83, %c0_84] : memref<16x128xf32, #tpu.memory_space<vmem>>, vector<1x128xf32>
      %207 = vector.shape_cast %206 : vector<1x128xf32> to vector<1x1x128xf32>
      %cst_85 = arith.constant dense<0.000000e+00> : vector<1xf32>
      %208 = vector.multi_reduction <add>, %207, %cst_85 [1, 2] : vector<1x1x128xf32> to vector<1xf32>
      %209 = vector.shape_cast %208 : vector<1xf32> to vector<1x1x1xf32>
      %210 = vector.extract %209[0, 0, 0] : f32 from vector<1x1x1xf32>
      %211 = arith.cmpf oge, %205, %22 : f32
      %c13_i32 = arith.constant 13 : i32
      %212 = arith.select %211, %c13_i32, %198 : i32
      %213 = arith.select %211, %205, %199 : f32
      %214 = arith.select %211, %210, %200 : f32
      %c14 = arith.constant 14 : index
      %c0_86 = arith.constant 0 : index
      %215 = vector.load %arg8[%c14, %c0_86] : memref<16x128xf32, #tpu.memory_space<vmem>>, vector<1x128xf32>
      %216 = vector.shape_cast %215 : vector<1x128xf32> to vector<1x1x128xf32>
      %cst_87 = arith.constant dense<0.000000e+00> : vector<1xf32>
      %217 = vector.multi_reduction <add>, %216, %cst_87 [1, 2] : vector<1x1x128xf32> to vector<1xf32>
      %218 = vector.shape_cast %217 : vector<1xf32> to vector<1x1x1xf32>
      %219 = vector.extract %218[0, 0, 0] : f32 from vector<1x1x1xf32>
      %c14_88 = arith.constant 14 : index
      %c0_89 = arith.constant 0 : index
      %220 = vector.load %arg9[%c14_88, %c0_89] : memref<16x128xf32, #tpu.memory_space<vmem>>, vector<1x128xf32>
      %221 = vector.shape_cast %220 : vector<1x128xf32> to vector<1x1x128xf32>
      %cst_90 = arith.constant dense<0.000000e+00> : vector<1xf32>
      %222 = vector.multi_reduction <add>, %221, %cst_90 [1, 2] : vector<1x1x128xf32> to vector<1xf32>
      %223 = vector.shape_cast %222 : vector<1xf32> to vector<1x1x1xf32>
      %224 = vector.extract %223[0, 0, 0] : f32 from vector<1x1x1xf32>
      %225 = arith.cmpf oge, %219, %22 : f32
      %c14_i32 = arith.constant 14 : i32
      %226 = arith.select %225, %c14_i32, %212 : i32
      %227 = arith.select %225, %219, %213 : f32
      %228 = arith.select %225, %224, %214 : f32
      %c15 = arith.constant 15 : index
      %c0_91 = arith.constant 0 : index
      %229 = vector.load %arg8[%c15, %c0_91] : memref<16x128xf32, #tpu.memory_space<vmem>>, vector<1x128xf32>
      %230 = vector.shape_cast %229 : vector<1x128xf32> to vector<1x1x128xf32>
      %cst_92 = arith.constant dense<0.000000e+00> : vector<1xf32>
      %231 = vector.multi_reduction <add>, %230, %cst_92 [1, 2] : vector<1x1x128xf32> to vector<1xf32>
      %232 = vector.shape_cast %231 : vector<1xf32> to vector<1x1x1xf32>
      %233 = vector.extract %232[0, 0, 0] : f32 from vector<1x1x1xf32>
      %c15_93 = arith.constant 15 : index
      %c0_94 = arith.constant 0 : index
      %234 = vector.load %arg9[%c15_93, %c0_94] : memref<16x128xf32, #tpu.memory_space<vmem>>, vector<1x128xf32>
      %235 = vector.shape_cast %234 : vector<1x128xf32> to vector<1x1x128xf32>
      %cst_95 = arith.constant dense<0.000000e+00> : vector<1xf32>
      %236 = vector.multi_reduction <add>, %235, %cst_95 [1, 2] : vector<1x1x128xf32> to vector<1xf32>
      %237 = vector.shape_cast %236 : vector<1xf32> to vector<1x1x1xf32>
      %238 = vector.extract %237[0, 0, 0] : f32 from vector<1x1x1xf32>
      %239 = arith.cmpf oge, %233, %22 : f32
      %c15_i32 = arith.constant 15 : i32
      %240 = arith.select %239, %c15_i32, %226 : i32
      %241 = arith.select %239, %233, %227 : f32
      %242 = arith.select %239, %238, %228 : f32
      %243 = arith.shli %240, %9 : i32
      %244 = arith.addi %10, %243 : i32
      %c0_96 = arith.constant 0 : index
      %245 = memref.load %arg7[%c0_96] : memref<1xi32, #tpu.memory_space<smem>>
      memref.store %244, %arg7[%c0_96] : memref<1xi32, #tpu.memory_space<smem>>
      %c6_i32_97 = arith.constant 6 : i32
      %246 = arith.cmpi eq, %arg0, %c6_i32_97 : i32
      %247 = arith.extui %246 : i1 to i32
      %c0_i32_98 = arith.constant 0 : i32
      %248 = arith.cmpi ne, %247, %c0_i32_98 : i32
      scf.if %248 {
        %249 = vector.broadcast %242 : f32 to vector<1x128xf32>
        %c0_99 = arith.constant 0 : index
        %c0_100 = arith.constant 0 : index
        %250 = vector.load %arg4[%c0_99, %c0_100] : memref<1x128xf32, #tpu.memory_space<vmem>>, vector<1x128xf32>
        tpu.vector_store %arg4[%c0_99, %c0_100], %249 {strides = array<i32>} : memref<1x128xf32, #tpu.memory_space<vmem>>, vector<1x128xf32>,
        %251 = vector.broadcast %241 : f32 to vector<1x128xf32>
        %c0_101 = arith.constant 0 : index
        %c0_102 = arith.constant 0 : index
        %252 = vector.load %arg5[%c0_101, %c0_102] : memref<1x128xf32, #tpu.memory_space<vmem>>, vector<1x128xf32>
        tpu.vector_store %arg5[%c0_101, %c0_102], %251 {strides = array<i32>} : memref<1x128xf32, #tpu.memory_space<vmem>>, vector<1x128xf32>,
        %253 = vector.broadcast %244 : i32 to vector<1x128xi32>
        %c0_103 = arith.constant 0 : index
        %c0_104 = arith.constant 0 : index
        %254 = vector.load %arg6[%c0_103, %c0_104] : memref<1x128xi32, #tpu.memory_space<vmem>>, vector<1x128xi32>
        tpu.vector_store %arg6[%c0_103, %c0_104], %253 {strides = array<i32>} : memref<1x128xi32, #tpu.memory_space<vmem>>, vector<1x128xi32>,
      } else {
      }
    } else {
    }
    return
  }
  func.func @transform_0(%arg0: i32, %arg1: i32, %arg2: memref<2xi32, #tpu.memory_space<smem>>) -> (i32, i32) {
    %c0_i32 = arith.constant 0 : i32
    %c0_i32_0 = arith.constant 0 : i32
    return %arg1, %c0_i32 : i32, i32
  }
  func.func @transform_1(%arg0: i32, %arg1: i32, %arg2: memref<2xi32, #tpu.memory_space<smem>>) -> (i32, i32) {
    %c0_i32 = arith.constant 0 : i32
    %c0_i32_0 = arith.constant 0 : i32
    %c0_i32_1 = arith.constant 0 : i32
    return %c0_i32, %c0_i32_0 : i32, i32
  }
  func.func @transform_2(%arg0: i32, %arg1: i32, %arg2: memref<2xi32, #tpu.memory_space<smem>>) -> (i32, i32) {
    %c0_i32 = arith.constant 0 : i32
    %c0_i32_0 = arith.constant 0 : i32
    %c0_i32_1 = arith.constant 0 : i32
    return %c0_i32, %c0_i32_0 : i32, i32
  }
  func.func @transform_3(%arg0: i32, %arg1: i32, %arg2: memref<2xi32, #tpu.memory_space<smem>>) -> (i32, i32) {
    %c0_i32 = arith.constant 0 : i32
    %c0_i32_0 = arith.constant 0 : i32
    %c0_i32_1 = arith.constant 0 : i32
    return %c0_i32, %c0_i32_0 : i32, i32
  }
}

</mosaic_0001>

<llo_original>
// kernel: balanced_bce_loss.2
$region0: #{balanced_bce_loss.2}
  #allocation0 [shape = 'u32[]', space=smem, size = 0x4, offset = 0x4, fixed_abs, tag = 'smem constant byte address 0x4 - core index']
  #allocation1 [shape = 'u32[144,128]{1,0:T(1,128)}', space=vmem, size = 0x12000, scoped, tag = 'internal scratch']
  %s0 = inlined_call_operand.vmem [shape: f32[16,128], index: 0, kind: input, shape index: {}]
  %s1 = inlined_call_operand.vmem [shape: bf16[16,128], index: 1, kind: input, shape index: {}]
  %s2 = inlined_call_operand.vmem [shape: bf16[16,128], index: 2, kind: input, shape index: {}]
  %s3 = inlined_call_operand.vmem [shape: s32[16,128], index: 3, kind: output, shape index: {0}]
  %s4 = inlined_call_operand.vmem [shape: f32[8,128], index: 4, kind: output, shape index: {1}]
  %5 = xla_tuple %s3, %s4
  %s6 = sld [smem:[#allocation0]]
  $region30: #{balanced_bce_loss.2} parent=0
    _
  %s8 = ssub.s32 1, %s6
  %s9 = scalar_select 0, %s8, %s6
  // Predicated region
  $region2: #{balanced_bce_loss.2} parent=0 // pred_check
    _
  $region3: #{balanced_bce_loss.2} parent=0 // pred_check_branch
    %11 = sbr.rel (0) target = $region5
  $region4: #{balanced_bce_loss.2} parent=0 // pred_region
    _
  $region5: #{balanced_bce_loss.2} parent=0 // pred_fallthru
    _
  // Predicated region
  $region6: #{balanced_bce_loss.2} parent=0 // pred_check
    _
  $region7: #{balanced_bce_loss.2} parent=0 // pred_check_branch
    %13 = sbr.rel (0) target = $region9
  $region8: #{balanced_bce_loss.2} parent=0 // pred_region
    _
  $region9: #{balanced_bce_loss.2} parent=0 // pred_fallthru
    _
  // Predicated region
  $region10: #{balanced_bce_loss.2} parent=0 // pred_check
    _
  $region11: #{balanced_bce_loss.2} parent=0 // pred_check_branch
    %15 = sbr.rel (0) target = $region13
  $region12: #{balanced_bce_loss.2} parent=0 // pred_region
    _
  $region13: #{balanced_bce_loss.2} parent=0 // pred_fallthru
    _
  %v16 = vld [vmem:[%s0] sm:$0xff]
  %v17 = vld [vmem:[%s0 + $0x8] sm:$0xff]
  %v18 = vld [vmem:[%s1] sm:$0xf]
  %v19 = vld [vmem:[%s1 + $0x4] sm:$0xf]
  %v20 = vunpack.c.l.bf16 %v18
  %v21 = vunpack.c.l.bf16 %v19
  %v22 = vld [vmem:[%s2] sm:$0xf]
  %v23 = vld [vmem:[%s2 + $0x4] sm:$0xf]
  %v24 = vunpack.c.l.bf16 %v22
  %v25 = vunpack.c.l.bf16 %v23
  %vm26 = vcmp.gt.f32.partialorder %v20, 0.5
  %vm27 = vcmp.gt.f32.partialorder %v21, 0.5
  %v28 = vsub.f32 1.0, %v16
  %v29 = vsub.f32 1.0, %v17
  %v30 = vsel %vm26, %v16, %v28
  %v31 = vsel %vm27, %v17, %v29
  %v32 = vlog2.pop %v30
  %v33 = vmul.f32 %v32, 0.6931472
  %v34 = vlog2.pop %v31
  %v35 = vmul.f32 %v34, 0.6931472
  %v36 = vmax.f32 %v33, -100.0
  %v37 = vmax.f32 %v35, -100.0
  %v38 = vsub.f32 0.0, %v36
  %v39 = vsub.f32 0.0, %v37
  %v40 = vmul.f32 %v20, %v24
  %v41 = vmul.f32 %v21, %v25
  %v42 = vsub.f32 %v24, %v40
  %v43 = vsub.f32 %v25, %v41
  %v44 = vmul.f32 %v38, %v24
  %v45 = vmul.f32 %v39, %v25
  %v46 = vmul.f32 %v44, %v20
  %v47 = vmul.f32 %v45, %v21
  %v48 = vsub.f32 %v44, %v46
  %v49 = vsub.f32 %v45, %v47
  %vm50 = vcmp.gt.f32.partialorder %v48, 0.0
  %vm51 = vcmp.gt.f32.partialorder %v49, 0.0
  %v54 = vsel %vm50, %v48, 0
  %v55 = vsel %vm51, %v49, 0
  %56 = vst [vmem:[%s3] sm:$0xff] %v54
  %57 = vst [vmem:[%s3 + $0x8] sm:$0xff] %v55
  %v58 = vadd.f32 %v46, %v47
  %v59 = vrot.slane %v58, 4
  %v60 = vadd.f32 %v58, %v59
  %v61 = vrot.slane %v60, 2
  %v62 = vadd.f32 %v60, %v61
  %v63 = vrot.slane %v62, 1
  %v64 = vadd.f32 %v62, %v63
  %v65 = vadd.f32 %v40, %v41
  %v66 = vrot.slane %v65, 4
  %v67 = vadd.f32 %v65, %v66
  %v68 = vrot.slane %v67, 2
  %v69 = vadd.f32 %v67, %v68
  %v70 = vrot.slane %v69, 1
  %v71 = vadd.f32 %v69, %v70
  %v72 = vadd.f32 %v42, %v43
  %v73 = vrot.slane %v72, 4
  %v74 = vadd.f32 %v72, %v73
  %v75 = vrot.slane %v74, 2
  %v76 = vadd.f32 %v74, %v75
  %v77 = vrot.slane %v76, 1
  %v78 = vadd.f32 %v76, %v77
  %vm79 = vcmp.ge.s32.totalorder %v54, 268435456
  %vm80 = vcmp.ge.s32.totalorder %v55, 268435456
  %v81 = vsel %vm79, 1.0, 0.0
  %v82 = vsel %vm80, 1.0, 0.0
  %v83 = vadd.f32 %v81, %v82
  %v84 = vrot.slane %v83, 4
  %v85 = vadd.f32 %v83, %v84
  %v86 = vrot.slane %v85, 2
  %v87 = vadd.f32 %v85, %v86
  %v88 = vrot.slane %v87, 1
  %v89 = vadd.f32 %v87, %v88
  %vm90 = vcmp.ge.s32.totalorder %v54, 536870912
  %vm91 = vcmp.ge.s32.totalorder %v55, 536870912
  %v92 = vsel %vm90, 1.0, 0.0
  %v93 = vsel %vm91, 1.0, 0.0
  %v94 = vadd.f32 %v92, %v93
  %v95 = vrot.slane %v94, 4
  %v96 = vadd.f32 %v94, %v95
  %v97 = vrot.slane %v96, 2
  %v98 = vadd.f32 %v96, %v97
  %v99 = vrot.slane %v98, 1
  %v100 = vadd.f32 %v98, %v99
  %vm101 = vcmp.ge.s32.totalorder %v54, 805306368
  %vm102 = vcmp.ge.s32.totalorder %v55, 805306368
  %v103 = vsel %vm101, 1.0, 0.0
  %v104 = vsel %vm102, 1.0, 0.0
  %v105 = vadd.f32 %v103, %v104
  %v106 = vrot.slane %v105, 4
  %v107 = vadd.f32 %v105, %v106
  %v108 = vrot.slane %v107, 2
  %v109 = vadd.f32 %v107, %v108
  %v110 = vrot.slane %v109, 1
  %v111 = vadd.f32 %v109, %v110
  %vm112 = vcmp.ge.s32.totalorder %v54, 1073741824
  %vm113 = vcmp.ge.s32.totalorder %v55, 1073741824
  %v114 = vsel %vm112, 1.0, 0.0
  %v115 = vsel %vm113, 1.0, 0.0
  %v116 = vadd.f32 %v114, %v115
  %v117 = vrot.slane %v116, 4
  %v118 = vadd.f32 %v116, %v117
  %v119 = vrot.slane %v118, 2
  %v120 = vadd.f32 %v118, %v119
  %v121 = vrot.slane %v120, 1
  %v122 = vadd.f32 %v120, %v121
  %vm123 = vcmask 1040384
  %v124 = vsel %vm123, %v64, %v71
  %vm125 = vcmask 1041408
  %v126 = vsel %vm125, %v124, %v78
  %vm127 = vcmask 1042432
  %v128 = vsel %vm127, %v126, %v89
  %vm129 = vcmask 1043456
  %v130 = vsel %vm129, %v128, %v100
  %vm131 = vcmask 1044480
  %v132 = vsel %vm131, %v130, %v111
  %vm133 = vcmask 1045504
  %v134 = vsel %vm133, %v132, %v122
  %vm135 = vcmask 1046528
  %v136 = vsel %vm135, %v134, 0.0
  %137 = vst [vmem:[%s4] sm:$0xff] %v136
  // Predicated region
  $region14: #{balanced_bce_loss.2} parent=0 // pred_check
    _
  $region15: #{balanced_bce_loss.2} parent=0 // pred_check_branch
    %139 = sbr.rel (0) target = $region17
  $region16: #{balanced_bce_loss.2} parent=0 // pred_region
    _
  $region17: #{balanced_bce_loss.2} parent=0 // pred_fallthru
    _
  // Predicated region
  $region18: #{balanced_bce_loss.2} parent=0 // pred_check
    _
  $region19: #{balanced_bce_loss.2} parent=0 // pred_check_branch
    %141 = sbr.rel (0) target = $region21
  $region20: #{balanced_bce_loss.2} parent=0 // pred_region
    _
  $region21: #{balanced_bce_loss.2} parent=0 // pred_fallthru
    _
  // Predicated region
  $region22: #{balanced_bce_loss.2} parent=0 // pred_check
    _
  $region23: #{balanced_bce_loss.2} parent=0 // pred_check_branch
    %143 = sbr.rel (0) target = $region25
  $region24: #{balanced_bce_loss.2} parent=0 // pred_region
    _
  $region25: #{balanced_bce_loss.2} parent=0 // pred_fallthru
    _
  // Predicated region
  $region26: #{balanced_bce_loss.2} parent=0 // pred_check
    _
  $region27: #{balanced_bce_loss.2} parent=0 // pred_check_branch
    %145 = sbr.rel (0) target = $region29
  $region28: #{balanced_bce_loss.2} parent=0 // pred_region
    _
  $region29: #{balanced_bce_loss.2} parent=0 // pred_fallthru
    _

// kernel: balanced_bce_loss.3
$region0: #{balanced_bce_loss.3}
  #allocation0 [shape = 'u32[]', space=smem, size = 0x4, offset = 0x4, fixed_abs, tag = 'smem constant byte address 0x4 - core index']
  #allocation1 [shape = 'u32[144,128]{1,0:T(1,128)}', space=vmem, size = 0x12000, scoped, tag = 'internal scratch']
  #allocation2 [shape = 's32[1]{0:T(128)}', space=smem, size = 0x200, scoped, tag = 'scratch operand']
  #allocation3 [shape = 'f32[16,128]{1,0:T(8,128)}', space=vmem, size = 0x2000, scoped, tag = 'scratch operand']
  #allocation4 [shape = 'f32[16,128]{1,0:T(8,128)}', space=vmem, size = 0x2000, scoped, tag = 'scratch operand']
  #allocation5 [shape = 's32[1]{0}', space=sflag, size = 0x4, scoped, tag = 'scoped memory for balanced_bce_loss.3']
  #allocation6 [shape = 'u8[512]{0}', space=smem, size = 0x200, scoped, tag = 'prefetched SMEM operand 0']
  %s0 = inlined_call_operand.vmem [shape: s32[2], index: 0, kind: input, shape index: {}]
  %s1 = inlined_call_operand.vmem [shape: s32[16,128], index: 1, kind: input, shape index: {}]
  %s2 = inlined_call_operand.vmem [shape: f32[1,128], index: 2, kind: output, shape index: {0}]
  %s3 = inlined_call_operand.vmem [shape: f32[1,128], index: 3, kind: output, shape index: {1}]
  %s4 = inlined_call_operand.vmem [shape: s32[1,128], index: 4, kind: output, shape index: {2}]
  %5 = xla_tuple %s2, %s3, %s4
  %s6 = sld [smem:[#allocation0]]
  $region77: #{balanced_bce_loss.3} parent=0
    _
  %s8 = ssub.s32 1, %s6
  %s9 = scalar_select 0, %s8, %s6
  %s10 = sshll.u32 %s0, 4
  %s11 = int_to_ptr.vmem [resolvable:$true] %s10
  %13 = dma.vmem_to_smem %s11, 16, [#allocation6], [#allocation5]
  %14 = dma.done [#allocation5], 16
  %15 = sfence
  loop: start=0, step=1, limit=9
  $region2: #{balanced_bce_loss.3} parent=0 // loop_pre_header
    _
  $region3: #{balanced_bce_loss.3} parent=0 // loop_header
    %s17 = sphi 0, %s21
    %p18 = scmp.ge.s32.totalorder %s17, 9
    %s24 = sphi 0, %s36
    %s25 = sphi 0, %s32
    %s26 = sphi 0, %s24
    %s27 = sphi 0, %s25
    %s28 = sphi 0, %s26
    %s29 = sphi 0, %s27
    %s39 = sphi 0, %s41
    %s42 = sphi 0, %s39
    %s43 = sphi 0, %s42
    %s59 = sphi 0, %s43
    %s63 = sphi 0, %s63
    %s65 = sphi 0, %s63
    %s66 = sphi 0, %s65
    %s80 = sphi 0, %s66
    %s84 = sphi 0, %s84
    %s86 = sphi 0, %s84
    %s87 = sphi 0, %s86
    %s101 = sphi 0, %s87
    %s105 = sphi 0, %s105
    %s107 = sphi 0, %s105
    %s108 = sphi 0, %s107
    %s122 = sphi 0, %s108
  $region4: #{balanced_bce_loss.3} parent=0 // loop_header_branch
    %20 = sbr.rel (%p18) target = $region8
  $region5: #{balanced_bce_loss.3} parent=0 // loop_body
    %s22 = ssub.s32 %s17, 1
    %s23 = ssub.s32 %s17, 2
    %s30 = sadd.s32 1, %s25
    %p31 = scmp.ge.s32.totalorder %s30, 1
    %s32 = scalar_select %p31, 0, %s30
    %s33 = sadd.s32 1, %s24
    %s34 = scalar_select %p31, %s33, %s24
    %p35 = scmp.ge.s32.totalorder %s34, 7
    %s36 = scalar_select %p35, 0, %s34
    %s37 = ssub.s32 %s25, %s32
    %p38 = scmp.eq.s32.totalorder %s37, 0
    %s40 = sadd.s32 %s39, 1
    %s41 = scalar_select %p38, %s39, %s40
    %p44 = pneg %p38
    %p45 = scmp.eq.s32.totalorder %s17, 6
    %p46 = por %p44, %p45
    %p47 = scmp.ne.s32.totalorder %s39, %s42
    %p48 = scmp.eq.s32.totalorder %s17, 0
    %p49 = por %p47, %p48
    %p50 = scmp.ne.s32.totalorder %s39, %s42
    %p51 = scmp.eq.s32.totalorder %s22, 6
    %p52 = por %p50, %p51
    %p53 = scmp.ne.s32.totalorder %s42, %s43
    %p54 = scmp.eq.s32.totalorder %s22, 0
    %p55 = por %p53, %p54
    %p56 = scmp.ne.s32.totalorder %s42, %s43
    %p57 = scmp.eq.s32.totalorder %s23, 6
    %p58 = por %p56, %p57
    %p60 = scmp.ne.s32.totalorder %s43, %s59
    %p61 = scmp.eq.s32.totalorder %s23, 0
    %p62 = por %p60, %p61
    %s64 = sadd.s32 %s63, 1
    %p67 = scmp.eq.s32.totalorder %s17, 6
    %p68 = scmp.ne.s32.totalorder %s63, %s65
    %p69 = scmp.eq.s32.totalorder %s17, 0
    %p70 = por %p68, %p69
    %p71 = scmp.ne.s32.totalorder %s63, %s65
    %p72 = scmp.eq.s32.totalorder %s22, 6
    %p73 = por %p71, %p72
    %p74 = scmp.ne.s32.totalorder %s65, %s66
    %p75 = scmp.eq.s32.totalorder %s22, 0
    %p76 = por %p74, %p75
    %p77 = scmp.ne.s32.totalorder %s65, %s66
    %p78 = scmp.eq.s32.totalorder %s23, 6
    %p79 = por %p77, %p78
    %p81 = scmp.ne.s32.totalorder %s66, %s80
    %p82 = scmp.eq.s32.totalorder %s23, 0
    %p83 = por %p81, %p82
    %s85 = sadd.s32 %s84, 1
    %p88 = scmp.eq.s32.totalorder %s17, 6
    %p89 = scmp.ne.s32.totalorder %s84, %s86
    %p90 = scmp.eq.s32.totalorder %s17, 0
    %p91 = por %p89, %p90
    %p92 = scmp.ne.s32.totalorder %s84, %s86
    %p93 = scmp.eq.s32.totalorder %s22, 6
    %p94 = por %p92, %p93
    %p95 = scmp.ne.s32.totalorder %s86, %s87
    %p96 = scmp.eq.s32.totalorder %s22, 0
    %p97 = por %p95, %p96
    %p98 = scmp.ne.s32.totalorder %s86, %s87
    %p99 = scmp.eq.s32.totalorder %s23, 6
    %p100 = por %p98, %p99
    %p102 = scmp.ne.s32.totalorder %s87, %s101
    %p103 = scmp.eq.s32.totalorder %s23, 0
    %p104 = por %p102, %p103
    %s106 = sadd.s32 %s105, 1
    %p109 = scmp.eq.s32.totalorder %s17, 6
    %p110 = scmp.ne.s32.totalorder %s105, %s107
    %p111 = scmp.eq.s32.totalorder %s17, 0
    %p112 = por %p110, %p111
    %p113 = scmp.ne.s32.totalorder %s105, %s107
    %p114 = scmp.eq.s32.totalorder %s22, 6
    %p115 = por %p113, %p114
    %p116 = scmp.ne.s32.totalorder %s107, %s108
    %p117 = scmp.eq.s32.totalorder %s22, 0
    %p118 = por %p116, %p117
    %p119 = scmp.ne.s32.totalorder %s107, %s108
    %p120 = scmp.eq.s32.totalorder %s23, 6
    %p121 = por %p119, %p120
    %p123 = scmp.ne.s32.totalorder %s108, %s122
    %p124 = scmp.eq.s32.totalorder %s23, 0
    %p125 = por %p123, %p124
    %p126 = scmp.le.s32.totalorder 1, %s17
    %p127 = scmp.lt.s32.totalorder %s17, 8
    %p128 = pnand %p126, %p127
    %p129 = pneg %p128
    // Predicated region
    $region9: #{balanced_bce_loss.3} parent=5 // pred_check
      _
    $region10: #{balanced_bce_loss.3} parent=5 // pred_check_branch
      %131 = sbr.rel (%p128) target = $region12
    $region11: #{balanced_bce_loss.3} parent=5 // pred_region
      %s132 = ssub.s32 %s17, 1
      // Predicated region
      $region13: #{balanced_bce_loss.3} parent=11 // pred_check
        %p133 = pneg %p55
      $region14: #{balanced_bce_loss.3} parent=11 // pred_check_branch
        %135 = sbr.rel (%p133) target = $region16
      $region15: #{balanced_bce_loss.3} parent=11 // pred_region
        %s136 = smul.u32 2, %s27
        %p137 = scmp.lt.s32.totalorder %s136, 1
        %s138 = scalar_select %p137, %s136, 1
        %s139 = smul.addr %s138, 8
        %s140 = scalar_lea.vmem %s1, %s139
        %s141 = smul.u32 2, %s27
      $region16: #{balanced_bce_loss.3} parent=11 // pred_fallthru
        _
    $region12: #{balanced_bce_loss.3} parent=5 // pred_fallthru
      _
    %p142 = scmp.lt.s32.totalorder %s17, 7
    // Predicated region
    $region17: #{balanced_bce_loss.3} parent=5 // pred_check
      %p143 = pneg %p142
    $region18: #{balanced_bce_loss.3} parent=5 // pred_check_branch
      %145 = sbr.rel (%p143) target = $region20
    $region19: #{balanced_bce_loss.3} parent=5 // pred_region
      _
    $region20: #{balanced_bce_loss.3} parent=5 // pred_fallthru
      _
    %p146 = scmp.le.s32.totalorder 1, %s17
    %p147 = scmp.lt.s32.totalorder %s17, 8
    %p148 = pnand %p146, %p147
    %p149 = pneg %p148
    // Predicated region
    $region21: #{balanced_bce_loss.3} parent=5 // pred_check
      _
    $region22: #{balanced_bce_loss.3} parent=5 // pred_check_branch
      %151 = sbr.rel (%p148) target = $region24
    $region23: #{balanced_bce_loss.3} parent=5 // pred_region
      %s152 = ssub.s32 %s17, 1
      %s153 = smul.u32 2, %s27
      %p154 = scmp.lt.s32.totalorder %s153, 1
      %s155 = scalar_select %p154, %s153, 1
      %s156 = smul.addr %s155, 8
      %s157 = scalar_lea.vmem %s1, %s156
      %p158 = pneg %p55
      %p159 = pneg %p52
      %p160 = pneg %p76
      %p161 = pneg %p73
      %p162 = pneg %p97
      %p163 = pneg %p94
      %p164 = pneg %p118
      %p165 = pneg %p115
      %s166 = smul.u32 2, %s27
      %p167 = scmp.lt.s32.totalorder %s166, 1
      %s168 = scalar_select %p167, %s166, 1
      %s169 = smul.addr %s168, 8
      %s170 = scalar_lea.vmem %s1, %s169
      %s171 = smul.u32 2, %s27
      %p172 = scmp.eq.s32.totalorder %s26, 0
      %p173 = scmp.eq.s32.totalorder %s27, 0
      %p174 = pnand %p172, %p173
      %p175 = pneg %p174
      // Predicated region
      $region25: #{balanced_bce_loss.3} parent=23 // pred_check
        _
      $region26: #{balanced_bce_loss.3} parent=23 // pred_check_branch
        %177 = sbr.rel (%p174) target = $region28
      $region27: #{balanced_bce_loss.3} parent=23 // pred_region
        %s178 = sld [smem:[#allocation6 + $0x1]]
        %s179 = scalar_lea.smem [#allocation2], 0
        %180 = sst [smem:[%s179]] %s178
        %181 = vst [vmem:[%s2] sm:$0x1] 0.0
        %182 = vst [vmem:[%s3] sm:$0x1] 0.0
        %183 = vst [vmem:[%s4] sm:$0x1] 0
      $region28: #{balanced_bce_loss.3} parent=23 // pred_fallthru
        _
      // Predicated region
      $region29: #{balanced_bce_loss.3} parent=23 // pred_check
        %p184 = pneg %p173
      $region30: #{balanced_bce_loss.3} parent=23 // pred_check_branch
        %186 = sbr.rel (%p184) target = $region32
      $region31: #{balanced_bce_loss.3} parent=23 // pred_region
        %187 = vst [vmem:[#allocation3] sm:$0xff] 0.0
        %188 = vst [vmem:[#allocation3 + $0x8] sm:$0xff] 0.0
        %189 = vst [vmem:[#allocation4] sm:$0xff] 0.0
        %190 = vst [vmem:[#allocation4 + $0x8] sm:$0xff] 0.0
      $region32: #{balanced_bce_loss.3} parent=23 // pred_fallthru
        _
      %s191 = ssub.s32 6, %s26
      %s192 = smul.u32 %s191, 4
      %s193 = sld [smem:[#allocation2]]
      %v194 = vld [vmem:[%s170] sm:$0xff]
      %v195 = vld [vmem:[%s170 + $0x8] sm:$0xff]
      %p196 = scmp.ne.s32.totalorder %s26, 6
      // Predicated region
      $region33: #{balanced_bce_loss.3} parent=23 // pred_check
        %p197 = pneg %p196
      $region34: #{balanced_bce_loss.3} parent=23 // pred_check_branch
        %199 = sbr.rel (%p197) target = $region36
      $region35: #{balanced_bce_loss.3} parent=23 // pred_region
        %s200 = sshll.u32 0, %s192
        %s201 = sadd.s32 %s193, %s200
        %v202 = vstv %s201
        %vm203 = vcmp.ge.s32.totalorder %v194, %v202
        %vm204 = vcmp.ge.s32.totalorder %v195, %v202
        %v205 = vsel %vm203, 1.0, 0.0
        %v206 = vsel %vm204, 1.0, 0.0
        %v207 = vadd.f32 %v205, %v206
        %v208 = vrot.slane %v207, 4
        %v209 = vadd.f32 %v207, %v208
        %v210 = vrot.slane %v209, 2
        %v211 = vadd.f32 %v209, %v210
        %v212 = vrot.slane %v211, 1
        %v213 = vadd.f32 %v211, %v212
        %s214 = sshll.u32 1, %s192
        %s215 = sadd.s32 %s193, %s214
        %v216 = vstv %s215
        %vm217 = vcmp.ge.s32.totalorder %v194, %v216
        %vm218 = vcmp.ge.s32.totalorder %v195, %v216
        %v219 = vsel %vm217, 1.0, 0.0
        %v220 = vsel %vm218, 1.0, 0.0
        %v221 = vadd.f32 %v219, %v220
        %v222 = vrot.slane %v221, 4
        %v223 = vadd.f32 %v221, %v222
        %v224 = vrot.slane %v223, 2
        %v225 = vadd.f32 %v223, %v224
        %v226 = vrot.slane %v225, 1
        %v227 = vadd.f32 %v225, %v226
        %s228 = sshll.u32 2, %s192
        %s229 = sadd.s32 %s193, %s228
        %v230 = vstv %s229
        %vm231 = vcmp.ge.s32.totalorder %v194, %v230
        %vm232 = vcmp.ge.s32.totalorder %v195, %v230
        %v233 = vsel %vm231, 1.0, 0.0
        %v234 = vsel %vm232, 1.0, 0.0
        %v235 = vadd.f32 %v233, %v234
        %v236 = vrot.slane %v235, 4
        %v237 = vadd.f32 %v235, %v236
        %v238 = vrot.slane %v237, 2
        %v239 = vadd.f32 %v237, %v238
        %v240 = vrot.slane %v239, 1
        %v241 = vadd.f32 %v239, %v240
        %s242 = sshll.u32 3, %s192
        %s243 = sadd.s32 %s193, %s242
        %v244 = vstv %s243
        %vm245 = vcmp.ge.s32.totalorder %v194, %v244
        %vm246 = vcmp.ge.s32.totalorder %v195, %v244
        %v247 = vsel %vm245, 1.0, 0.0
        %v248 = vsel %vm246, 1.0, 0.0
        %v249 = vadd.f32 %v247, %v248
        %v250 = vrot.slane %v249, 4
        %v251 = vadd.f32 %v249, %v250
        %v252 = vrot.slane %v251, 2
        %v253 = vadd.f32 %v251, %v252
        %v254 = vrot.slane %v253, 1
        %v255 = vadd.f32 %v253, %v254
        %s256 = sshll.u32 4, %s192
        %s257 = sadd.s32 %s193, %s256
        %v258 = vstv %s257
        %vm259 = vcmp.ge.s32.totalorder %v194, %v258
        %vm260 = vcmp.ge.s32.totalorder %v195, %v258
        %v261 = vsel %vm259, 1.0, 0.0
        %v262 = vsel %vm260, 1.0, 0.0
        %v263 = vadd.f32 %v261, %v262
        %v264 = vrot.slane %v263, 4
        %v265 = vadd.f32 %v263, %v264
        %v266 = vrot.slane %v265, 2
        %v267 = vadd.f32 %v265, %v266
        %v268 = vrot.slane %v267, 1
        %v269 = vadd.f32 %v267, %v268
        %s270 = sshll.u32 5, %s192
        %s271 = sadd.s32 %s193, %s270
        %v272 = vstv %s271
        %vm273 = vcmp.ge.s32.totalorder %v194, %v272
        %vm274 = vcmp.ge.s32.totalorder %v195, %v272
        %v275 = vsel %vm273, 1.0, 0.0
        %v276 = vsel %vm274, 1.0, 0.0
        %v277 = vadd.f32 %v275, %v276
        %v278 = vrot.slane %v277, 4
        %v279 = vadd.f32 %v277, %v278
        %v280 = vrot.slane %v279, 2
        %v281 = vadd.f32 %v279, %v280
        %v282 = vrot.slane %v281, 1
        %v283 = vadd.f32 %v281, %v282
        %s284 = sshll.u32 6, %s192
        %s285 = sadd.s32 %s193, %s284
        %v286 = vstv %s285
        %vm287 = vcmp.ge.s32.totalorder %v194, %v286
        %vm288 = vcmp.ge.s32.totalorder %v195, %v286
        %v289 = vsel %vm287, 1.0, 0.0
        %v290 = vsel %vm288, 1.0, 0.0
        %v291 = vadd.f32 %v289, %v290
        %v292 = vrot.slane %v291, 4
        %v293 = vadd.f32 %v291, %v292
        %v294 = vrot.slane %v293, 2
        %v295 = vadd.f32 %v293, %v294
        %v296 = vrot.slane %v295, 1
        %v297 = vadd.f32 %v295, %v296
        %s298 = sshll.u32 7, %s192
        %s299 = sadd.s32 %s193, %s298
        %v300 = vstv %s299
        %vm301 = vcmp.ge.s32.totalorder %v194, %v300
        %vm302 = vcmp.ge.s32.totalorder %v195, %v300
        %v303 = vsel %vm301, 1.0, 0.0
        %v304 = vsel %vm302, 1.0, 0.0
        %v305 = vadd.f32 %v303, %v304
        %v306 = vrot.slane %v305, 4
        %v307 = vadd.f32 %v305, %v306
        %v308 = vrot.slane %v307, 2
        %v309 = vadd.f32 %v307, %v308
        %v310 = vrot.slane %v309, 1
        %v311 = vadd.f32 %v309, %v310
        %s312 = sshll.u32 8, %s192
        %s313 = sadd.s32 %s193, %s312
        %v314 = vstv %s313
        %vm315 = vcmp.ge.s32.totalorder %v194, %v314
        %vm316 = vcmp.ge.s32.totalorder %v195, %v314
        %v317 = vsel %vm315, 1.0, 0.0
        %v318 = vsel %vm316, 1.0, 0.0
        %v319 = vadd.f32 %v317, %v318
        %v320 = vrot.slane %v319, 4
        %v321 = vadd.f32 %v319, %v320
        %v322 = vrot.slane %v321, 2
        %v323 = vadd.f32 %v321, %v322
        %v324 = vrot.slane %v323, 1
        %v325 = vadd.f32 %v323, %v324
        %s326 = sshll.u32 9, %s192
        %s327 = sadd.s32 %s193, %s326
        %v328 = vstv %s327
        %vm329 = vcmp.ge.s32.totalorder %v194, %v328
        %vm330 = vcmp.ge.s32.totalorder %v195, %v328
        %v331 = vsel %vm329, 1.0, 0.0
        %v332 = vsel %vm330, 1.0, 0.0
        %v333 = vadd.f32 %v331, %v332
        %v334 = vrot.slane %v333, 4
        %v335 = vadd.f32 %v333, %v334
        %v336 = vrot.slane %v335, 2
        %v337 = vadd.f32 %v335, %v336
        %v338 = vrot.slane %v337, 1
        %v339 = vadd.f32 %v337, %v338
        %s340 = sshll.u32 10, %s192
        %s341 = sadd.s32 %s193, %s340
        %v342 = vstv %s341
        %vm343 = vcmp.ge.s32.totalorder %v194, %v342
        %vm344 = vcmp.ge.s32.totalorder %v195, %v342
        %v345 = vsel %vm343, 1.0, 0.0
        %v346 = vsel %vm344, 1.0, 0.0
        %v347 = vadd.f32 %v345, %v346
        %v348 = vrot.slane %v347, 4
        %v349 = vadd.f32 %v347, %v348
        %v350 = vrot.slane %v349, 2
        %v351 = vadd.f32 %v349, %v350
        %v352 = vrot.slane %v351, 1
        %v353 = vadd.f32 %v351, %v352
        %s354 = sshll.u32 11, %s192
        %s355 = sadd.s32 %s193, %s354
        %v356 = vstv %s355
        %vm357 = vcmp.ge.s32.totalorder %v194, %v356
        %vm358 = vcmp.ge.s32.totalorder %v195, %v356
        %v359 = vsel %vm357, 1.0, 0.0
        %v360 = vsel %vm358, 1.0, 0.0
        %v361 = vadd.f32 %v359, %v360
        %v362 = vrot.slane %v361, 4
        %v363 = vadd.f32 %v361, %v362
        %v364 = vrot.slane %v363, 2
        %v365 = vadd.f32 %v363, %v364
        %v366 = vrot.slane %v365, 1
        %v367 = vadd.f32 %v365, %v366
        %s368 = sshll.u32 12, %s192
        %s369 = sadd.s32 %s193, %s368
        %v370 = vstv %s369
        %vm371 = vcmp.ge.s32.totalorder %v194, %v370
        %vm372 = vcmp.ge.s32.totalorder %v195, %v370
        %v373 = vsel %vm371, 1.0, 0.0
        %v374 = vsel %vm372, 1.0, 0.0
        %v375 = vadd.f32 %v373, %v374
        %v376 = vrot.slane %v375, 4
        %v377 = vadd.f32 %v375, %v376
        %v378 = vrot.slane %v377, 2
        %v379 = vadd.f32 %v377, %v378
        %v380 = vrot.slane %v379, 1
        %v381 = vadd.f32 %v379, %v380
        %s382 = sshll.u32 13, %s192
        %s383 = sadd.s32 %s193, %s382
        %v384 = vstv %s383
        %vm385 = vcmp.ge.s32.totalorder %v194, %v384
        %vm386 = vcmp.ge.s32.totalorder %v195, %v384
        %v387 = vsel %vm385, 1.0, 0.0
        %v388 = vsel %vm386, 1.0, 0.0
        %v389 = vadd.f32 %v387, %v388
        %v390 = vrot.slane %v389, 4
        %v391 = vadd.f32 %v389, %v390
        %v392 = vrot.slane %v391, 2
        %v393 = vadd.f32 %v391, %v392
        %v394 = vrot.slane %v393, 1
        %v395 = vadd.f32 %v393, %v394
        %s396 = sshll.u32 14, %s192
        %s397 = sadd.s32 %s193, %s396
        %v398 = vstv %s397
        %vm399 = vcmp.ge.s32.totalorder %v194, %v398
        %vm400 = vcmp.ge.s32.totalorder %v195, %v398
        %v401 = vsel %vm399, 1.0, 0.0
        %v402 = vsel %vm400, 1.0, 0.0
        %v403 = vadd.f32 %v401, %v402
        %v404 = vrot.slane %v403, 4
        %v405 = vadd.f32 %v403, %v404
        %v406 = vrot.slane %v405, 2
        %v407 = vadd.f32 %v405, %v406
        %v408 = vrot.slane %v407, 1
        %v409 = vadd.f32 %v407, %v408
        %s410 = sshll.u32 15, %s192
        %s411 = sadd.s32 %s193, %s410
        %v412 = vstv %s411
        %vm413 = vcmp.ge.s32.totalorder %v194, %v412
        %vm414 = vcmp.ge.s32.totalorder %v195, %v412
        %v415 = vsel %vm413, 1.0, 0.0
        %v416 = vsel %vm414, 1.0, 0.0
        %v417 = vadd.f32 %v415, %v416
        %v418 = vrot.slane %v417, 4
        %v419 = vadd.f32 %v417, %v418
        %v420 = vrot.slane %v419, 2
        %v421 = vadd.f32 %v419, %v420
        %v422 = vrot.slane %v421, 1
        %v423 = vadd.f32 %v421, %v422
        %v424 = vld [vmem:[#allocation3] sm:$0xff]
        %v425 = vld [vmem:[#allocation3 + $0x8] sm:$0xff]
        %vm426 = vcmask 1040384
        %v427 = vsel %vm426, %v213, %v227
        %vm428 = vcmask 1041408
        %v429 = vsel %vm428, %v427, %v241
        %vm430 = vcmask 1042432
        %v431 = vsel %vm430, %v429, %v255
        %vm432 = vcmask 1043456
        %v433 = vsel %vm432, %v431, %v269
        %vm434 = vcmask 1044480
        %v435 = vsel %vm434, %v433, %v283
        %vm436 = vcmask 1045504
        %v437 = vsel %vm436, %v435, %v297
        %vm438 = vcmask 1046528
        %v439 = vsel %vm438, %v437, %v311
        %v440 = vsel %vm426, %v325, %v339
        %v441 = vsel %vm428, %v440, %v353
        %v442 = vsel %vm430, %v441, %v367
        %v443 = vsel %vm432, %v442, %v381
        %v444 = vsel %vm434, %v443, %v395
        %v445 = vsel %vm436, %v444, %v409
        %v446 = vsel %vm438, %v445, %v423
        %v447 = vadd.f32 %v424, %v439
        %v448 = vadd.f32 %v425, %v446
        %449 = vst [vmem:[#allocation3] sm:$0xff] %v447
        %450 = vst [vmem:[#allocation3 + $0x8] sm:$0xff] %v448
      $region36: #{balanced_bce_loss.3} parent=23 // pred_fallthru
        _
      %p451 = scmp.eq.s32.totalorder %s26, 6
      // Predicated region
      $region37: #{balanced_bce_loss.3} parent=23 // pred_check
        %p452 = pneg %p451
      $region38: #{balanced_bce_loss.3} parent=23 // pred_check_branch
        %454 = sbr.rel (%p452) target = $region40
      $region39: #{balanced_bce_loss.3} parent=23 // pred_region
        %s457 = sshll.u32 0, %s192
        %s458 = sadd.s32 %s193, %s457
        %v459 = vstv %s458
        %vm460 = vcmp.ge.s32.totalorder %v194, %v459
        %vm461 = vcmp.ge.s32.totalorder %v195, %v459
        %v462 = vsel %vm460, 1.0, 0.0
        %v463 = vsel %vm461, 1.0, 0.0
        %v464 = vadd.f32 %v462, %v463
        %v465 = vrot.slane %v464, 4
        %v466 = vadd.f32 %v464, %v465
        %v467 = vrot.slane %v466, 2
        %v468 = vadd.f32 %v466, %v467
        %v469 = vrot.slane %v468, 1
        %v470 = vadd.f32 %v468, %v469
        %v471 = vsel %vm460, %v194, 0.0
        %v472 = vsel %vm461, %v195, 0.0
        %v473 = vadd.f32 %v471, %v472
        %v474 = vrot.slane %v473, 4
        %v475 = vadd.f32 %v473, %v474
        %v476 = vrot.slane %v475, 2
        %v477 = vadd.f32 %v475, %v476
        %v478 = vrot.slane %v477, 1
        %v479 = vadd.f32 %v477, %v478
        %s480 = sshll.u32 1, %s192
        %s481 = sadd.s32 %s193, %s480
        %v482 = vstv %s481
        %vm483 = vcmp.ge.s32.totalorder %v194, %v482
        %vm484 = vcmp.ge.s32.totalorder %v195, %v482
        %v485 = vsel %vm483, 1.0, 0.0
        %v486 = vsel %vm484, 1.0, 0.0
        %v487 = vadd.f32 %v485, %v486
        %v488 = vrot.slane %v487, 4
        %v489 = vadd.f32 %v487, %v488
        %v490 = vrot.slane %v489, 2
        %v491 = vadd.f32 %v489, %v490
        %v492 = vrot.slane %v491, 1
        %v493 = vadd.f32 %v491, %v492
        %v494 = vsel %vm483, %v194, 0.0
        %v495 = vsel %vm484, %v195, 0.0
        %v496 = vadd.f32 %v494, %v495
        %v497 = vrot.slane %v496, 4
        %v498 = vadd.f32 %v496, %v497
        %v499 = vrot.slane %v498, 2
        %v500 = vadd.f32 %v498, %v499
        %v501 = vrot.slane %v500, 1
        %v502 = vadd.f32 %v500, %v501
        %s503 = sshll.u32 2, %s192
        %s504 = sadd.s32 %s193, %s503
        %v505 = vstv %s504
        %vm506 = vcmp.ge.s32.totalorder %v194, %v505
        %vm507 = vcmp.ge.s32.totalorder %v195, %v505
        %v508 = vsel %vm506, 1.0, 0.0
        %v509 = vsel %vm507, 1.0, 0.0
        %v510 = vadd.f32 %v508, %v509
        %v511 = vrot.slane %v510, 4
        %v512 = vadd.f32 %v510, %v511
        %v513 = vrot.slane %v512, 2
        %v514 = vadd.f32 %v512, %v513
        %v515 = vrot.slane %v514, 1
        %v516 = vadd.f32 %v514, %v515
        %v517 = vsel %vm506, %v194, 0.0
        %v518 = vsel %vm507, %v195, 0.0
        %v519 = vadd.f32 %v517, %v518
        %v520 = vrot.slane %v519, 4
        %v521 = vadd.f32 %v519, %v520
        %v522 = vrot.slane %v521, 2
        %v523 = vadd.f32 %v521, %v522
        %v524 = vrot.slane %v523, 1
        %v525 = vadd.f32 %v523, %v524
        %s526 = sshll.u32 3, %s192
        %s527 = sadd.s32 %s193, %s526
        %v528 = vstv %s527
        %vm529 = vcmp.ge.s32.totalorder %v194, %v528
        %vm530 = vcmp.ge.s32.totalorder %v195, %v528
        %v531 = vsel %vm529, 1.0, 0.0
        %v532 = vsel %vm530, 1.0, 0.0
        %v533 = vadd.f32 %v531, %v532
        %v534 = vrot.slane %v533, 4
        %v535 = vadd.f32 %v533, %v534
        %v536 = vrot.slane %v535, 2
        %v537 = vadd.f32 %v535, %v536
        %v538 = vrot.slane %v537, 1
        %v539 = vadd.f32 %v537, %v538
        %v540 = vsel %vm529, %v194, 0.0
        %v541 = vsel %vm530, %v195, 0.0
        %v542 = vadd.f32 %v540, %v541
        %v543 = vrot.slane %v542, 4
        %v544 = vadd.f32 %v542, %v543
        %v545 = vrot.slane %v544, 2
        %v546 = vadd.f32 %v544, %v545
        %v547 = vrot.slane %v546, 1
        %v548 = vadd.f32 %v546, %v547
        %s549 = sshll.u32 4, %s192
        %s550 = sadd.s32 %s193, %s549
        %v551 = vstv %s550
        %vm552 = vcmp.ge.s32.totalorder %v194, %v551
        %vm553 = vcmp.ge.s32.totalorder %v195, %v551
        %v554 = vsel %vm552, 1.0, 0.0
        %v555 = vsel %vm553, 1.0, 0.0
        %v556 = vadd.f32 %v554, %v555
        %v557 = vrot.slane %v556, 4
        %v558 = vadd.f32 %v556, %v557
        %v559 = vrot.slane %v558, 2
        %v560 = vadd.f32 %v558, %v559
        %v561 = vrot.slane %v560, 1
        %v562 = vadd.f32 %v560, %v561
        %v563 = vsel %vm552, %v194, 0.0
        %v564 = vsel %vm553, %v195, 0.0
        %v565 = vadd.f32 %v563, %v564
        %v566 = vrot.slane %v565, 4
        %v567 = vadd.f32 %v565, %v566
        %v568 = vrot.slane %v567, 2
        %v569 = vadd.f32 %v567, %v568
        %v570 = vrot.slane %v569, 1
        %v571 = vadd.f32 %v569, %v570
        %s572 = sshll.u32 5, %s192
        %s573 = sadd.s32 %s193, %s572
        %v574 = vstv %s573
        %vm575 = vcmp.ge.s32.totalorder %v194, %v574
        %vm576 = vcmp.ge.s32.totalorder %v195, %v574
        %v577 = vsel %vm575, 1.0, 0.0
        %v578 = vsel %vm576, 1.0, 0.0
        %v579 = vadd.f32 %v577, %v578
        %v580 = vrot.slane %v579, 4
        %v581 = vadd.f32 %v579, %v580
        %v582 = vrot.slane %v581, 2
        %v583 = vadd.f32 %v581, %v582
        %v584 = vrot.slane %v583, 1
        %v585 = vadd.f32 %v583, %v584
        %v586 = vsel %vm575, %v194, 0.0
        %v587 = vsel %vm576, %v195, 0.0
        %v588 = vadd.f32 %v586, %v587
        %v589 = vrot.slane %v588, 4
        %v590 = vadd.f32 %v588, %v589
        %v591 = vrot.slane %v590, 2
        %v592 = vadd.f32 %v590, %v591
        %v593 = vrot.slane %v592, 1
        %v594 = vadd.f32 %v592, %v593
        %s595 = sshll.u32 6, %s192
        %s596 = sadd.s32 %s193, %s595
        %v597 = vstv %s596
        %vm598 = vcmp.ge.s32.totalorder %v194, %v597
        %vm599 = vcmp.ge.s32.totalorder %v195, %v597
        %v600 = vsel %vm598, 1.0, 0.0
        %v601 = vsel %vm599, 1.0, 0.0
        %v602 = vadd.f32 %v600, %v601
        %v603 = vrot.slane %v602, 4
        %v604 = vadd.f32 %v602, %v603
        %v605 = vrot.slane %v604, 2
        %v606 = vadd.f32 %v604, %v605
        %v607 = vrot.slane %v606, 1
        %v608 = vadd.f32 %v606, %v607
        %v609 = vsel %vm598, %v194, 0.0
        %v610 = vsel %vm599, %v195, 0.0
        %v611 = vadd.f32 %v609, %v610
        %v612 = vrot.slane %v611, 4
        %v613 = vadd.f32 %v611, %v612
        %v614 = vrot.slane %v613, 2
        %v615 = vadd.f32 %v613, %v614
        %v616 = vrot.slane %v615, 1
        %v617 = vadd.f32 %v615, %v616
        %s618 = sshll.u32 7, %s192
        %s619 = sadd.s32 %s193, %s618
        %v620 = vstv %s619
        %vm621 = vcmp.ge.s32.totalorder %v194, %v620
        %vm622 = vcmp.ge.s32.totalorder %v195, %v620
        %v623 = vsel %vm621, 1.0, 0.0
        %v624 = vsel %vm622, 1.0, 0.0
        %v625 = vadd.f32 %v623, %v624
        %v626 = vrot.slane %v625, 4
        %v627 = vadd.f32 %v625, %v626
        %v628 = vrot.slane %v627, 2
        %v629 = vadd.f32 %v627, %v628
        %v630 = vrot.slane %v629, 1
        %v631 = vadd.f32 %v629, %v630
        %v632 = vsel %vm621, %v194, 0.0
        %v633 = vsel %vm622, %v195, 0.0
        %v634 = vadd.f32 %v632, %v633
        %v635 = vrot.slane %v634, 4
        %v636 = vadd.f32 %v634, %v635
        %v637 = vrot.slane %v636, 2
        %v638 = vadd.f32 %v636, %v637
        %v639 = vrot.slane %v638, 1
        %v640 = vadd.f32 %v638, %v639
        %s641 = sshll.u32 8, %s192
        %s642 = sadd.s32 %s193, %s641
        %v643 = vstv %s642
        %vm644 = vcmp.ge.s32.totalorder %v194, %v643
        %vm645 = vcmp.ge.s32.totalorder %v195, %v643
        %v646 = vsel %vm644, 1.0, 0.0
        %v647 = vsel %vm645, 1.0, 0.0
        %v648 = vadd.f32 %v646, %v647
        %v649 = vrot.slane %v648, 4
        %v650 = vadd.f32 %v648, %v649
        %v651 = vrot.slane %v650, 2
        %v652 = vadd.f32 %v650, %v651
        %v653 = vrot.slane %v652, 1
        %v654 = vadd.f32 %v652, %v653
        %v655 = vsel %vm644, %v194, 0.0
        %v656 = vsel %vm645, %v195, 0.0
        %v657 = vadd.f32 %v655, %v656
        %v658 = vrot.slane %v657, 4
        %v659 = vadd.f32 %v657, %v658
        %v660 = vrot.slane %v659, 2
        %v661 = vadd.f32 %v659, %v660
        %v662 = vrot.slane %v661, 1
        %v663 = vadd.f32 %v661, %v662
        %s664 = sshll.u32 9, %s192
        %s665 = sadd.s32 %s193, %s664
        %v666 = vstv %s665
        %vm667 = vcmp.ge.s32.totalorder %v194, %v666
        %vm668 = vcmp.ge.s32.totalorder %v195, %v666
        %v669 = vsel %vm667, 1.0, 0.0
        %v670 = vsel %vm668, 1.0, 0.0
        %v671 = vadd.f32 %v669, %v670
        %v672 = vrot.slane %v671, 4
        %v673 = vadd.f32 %v671, %v672
        %v674 = vrot.slane %v673, 2
        %v675 = vadd.f32 %v673, %v674
        %v676 = vrot.slane %v675, 1
        %v677 = vadd.f32 %v675, %v676
        %v678 = vsel %vm667, %v194, 0.0
        %v679 = vsel %vm668, %v195, 0.0
        %v680 = vadd.f32 %v678, %v679
        %v681 = vrot.slane %v680, 4
        %v682 = vadd.f32 %v680, %v681
        %v683 = vrot.slane %v682, 2
        %v684 = vadd.f32 %v682, %v683
        %v685 = vrot.slane %v684, 1
        %v686 = vadd.f32 %v684, %v685
        %s687 = sshll.u32 10, %s192
        %s688 = sadd.s32 %s193, %s687
        %v689 = vstv %s688
        %vm690 = vcmp.ge.s32.totalorder %v194, %v689
        %vm691 = vcmp.ge.s32.totalorder %v195, %v689
        %v692 = vsel %vm690, 1.0, 0.0
        %v693 = vsel %vm691, 1.0, 0.0
        %v694 = vadd.f32 %v692, %v693
        %v695 = vrot.slane %v694, 4
        %v696 = vadd.f32 %v694, %v695
        %v697 = vrot.slane %v696, 2
        %v698 = vadd.f32 %v696, %v697
        %v699 = vrot.slane %v698, 1
        %v700 = vadd.f32 %v698, %v699
        %v701 = vsel %vm690, %v194, 0.0
        %v702 = vsel %vm691, %v195, 0.0
        %v703 = vadd.f32 %v701, %v702
        %v704 = vrot.slane %v703, 4
        %v705 = vadd.f32 %v703, %v704
        %v706 = vrot.slane %v705, 2
        %v707 = vadd.f32 %v705, %v706
        %v708 = vrot.slane %v707, 1
        %v709 = vadd.f32 %v707, %v708
        %s710 = sshll.u32 11, %s192
        %s711 = sadd.s32 %s193, %s710
        %v712 = vstv %s711
        %vm713 = vcmp.ge.s32.totalorder %v194, %v712
        %vm714 = vcmp.ge.s32.totalorder %v195, %v712
        %v715 = vsel %vm713, 1.0, 0.0
        %v716 = vsel %vm714, 1.0, 0.0
        %v717 = vadd.f32 %v715, %v716
        %v718 = vrot.slane %v717, 4
        %v719 = vadd.f32 %v717, %v718
        %v720 = vrot.slane %v719, 2
        %v721 = vadd.f32 %v719, %v720
        %v722 = vrot.slane %v721, 1
        %v723 = vadd.f32 %v721, %v722
        %v724 = vsel %vm713, %v194, 0.0
        %v725 = vsel %vm714, %v195, 0.0
        %v726 = vadd.f32 %v724, %v725
        %v727 = vrot.slane %v726, 4
        %v728 = vadd.f32 %v726, %v727
        %v729 = vrot.slane %v728, 2
        %v730 = vadd.f32 %v728, %v729
        %v731 = vrot.slane %v730, 1
        %v732 = vadd.f32 %v730, %v731
        %s733 = sshll.u32 12, %s192
        %s734 = sadd.s32 %s193, %s733
        %v735 = vstv %s734
        %vm736 = vcmp.ge.s32.totalorder %v194, %v735
        %vm737 = vcmp.ge.s32.totalorder %v195, %v735
        %v738 = vsel %vm736, 1.0, 0.0
        %v739 = vsel %vm737, 1.0, 0.0
        %v740 = vadd.f32 %v738, %v739
        %v741 = vrot.slane %v740, 4
        %v742 = vadd.f32 %v740, %v741
        %v743 = vrot.slane %v742, 2
        %v744 = vadd.f32 %v742, %v743
        %v745 = vrot.slane %v744, 1
        %v746 = vadd.f32 %v744, %v745
        %v747 = vsel %vm736, %v194, 0.0
        %v748 = vsel %vm737, %v195, 0.0
        %v749 = vadd.f32 %v747, %v748
        %v750 = vrot.slane %v749, 4
        %v751 = vadd.f32 %v749, %v750
        %v752 = vrot.slane %v751, 2
        %v753 = vadd.f32 %v751, %v752
        %v754 = vrot.slane %v753, 1
        %v755 = vadd.f32 %v753, %v754
        %s756 = sshll.u32 13, %s192
        %s757 = sadd.s32 %s193, %s756
        %v758 = vstv %s757
        %vm759 = vcmp.ge.s32.totalorder %v194, %v758
        %vm760 = vcmp.ge.s32.totalorder %v195, %v758
        %v761 = vsel %vm759, 1.0, 0.0
        %v762 = vsel %vm760, 1.0, 0.0
        %v763 = vadd.f32 %v761, %v762
        %v764 = vrot.slane %v763, 4
        %v765 = vadd.f32 %v763, %v764
        %v766 = vrot.slane %v765, 2
        %v767 = vadd.f32 %v765, %v766
        %v768 = vrot.slane %v767, 1
        %v769 = vadd.f32 %v767, %v768
        %v770 = vsel %vm759, %v194, 0.0
        %v771 = vsel %vm760, %v195, 0.0
        %v772 = vadd.f32 %v770, %v771
        %v773 = vrot.slane %v772, 4
        %v774 = vadd.f32 %v772, %v773
        %v775 = vrot.slane %v774, 2
        %v776 = vadd.f32 %v774, %v775
        %v777 = vrot.slane %v776, 1
        %v778 = vadd.f32 %v776, %v777
        %s779 = sshll.u32 14, %s192
        %s780 = sadd.s32 %s193, %s779
        %v781 = vstv %s780
        %vm782 = vcmp.ge.s32.totalorder %v194, %v781
        %vm783 = vcmp.ge.s32.totalorder %v195, %v781
        %v784 = vsel %vm782, 1.0, 0.0
        %v785 = vsel %vm783, 1.0, 0.0
        %v786 = vadd.f32 %v784, %v785
        %v787 = vrot.slane %v786, 4
        %v788 = vadd.f32 %v786, %v787
        %v789 = vrot.slane %v788, 2
        %v790 = vadd.f32 %v788, %v789
        %v791 = vrot.slane %v790, 1
        %v792 = vadd.f32 %v790, %v791
        %v793 = vsel %vm782, %v194, 0.0
        %v794 = vsel %vm783, %v195, 0.0
        %v795 = vadd.f32 %v793, %v794
        %v796 = vrot.slane %v795, 4
        %v797 = vadd.f32 %v795, %v796
        %v798 = vrot.slane %v797, 2
        %v799 = vadd.f32 %v797, %v798
        %v800 = vrot.slane %v799, 1
        %v801 = vadd.f32 %v799, %v800
        %s802 = sshll.u32 15, %s192
        %s803 = sadd.s32 %s193, %s802
        %v804 = vstv %s803
        %vm805 = vcmp.ge.s32.totalorder %v194, %v804
        %vm806 = vcmp.ge.s32.totalorder %v195, %v804
        %v807 = vsel %vm805, 1.0, 0.0
        %v808 = vsel %vm806, 1.0, 0.0
        %v809 = vadd.f32 %v807, %v808
        %v810 = vrot.slane %v809, 4
        %v811 = vadd.f32 %v809, %v810
        %v812 = vrot.slane %v811, 2
        %v813 = vadd.f32 %v811, %v812
        %v814 = vrot.slane %v813, 1
        %v815 = vadd.f32 %v813, %v814
        %v816 = vsel %vm805, %v194, 0.0
        %v817 = vsel %vm806, %v195, 0.0
        %v818 = vadd.f32 %v816, %v817
        %v819 = vrot.slane %v818, 4
        %v820 = vadd.f32 %v818, %v819
        %v821 = vrot.slane %v820, 2
        %v822 = vadd.f32 %v820, %v821
        %v823 = vrot.slane %v822, 1
        %v824 = vadd.f32 %v822, %v823
        %v825 = vld [vmem:[#allocation3] sm:$0xff]
        %v826 = vld [vmem:[#allocation3 + $0x8] sm:$0xff]
        %vm827 = vcmask 1040384
        %v828 = vsel %vm827, %v470, %v493
        %vm829 = vcmask 1041408
        %v830 = vsel %vm829, %v828, %v516
        %vm831 = vcmask 1042432
        %v832 = vsel %vm831, %v830, %v539
        %vm833 = vcmask 1043456
        %v834 = vsel %vm833, %v832, %v562
        %vm835 = vcmask 1044480
        %v836 = vsel %vm835, %v834, %v585
        %vm837 = vcmask 1045504
        %v838 = vsel %vm837, %v836, %v608
        %vm839 = vcmask 1046528
        %v840 = vsel %vm839, %v838, %v631
        %v841 = vsel %vm827, %v654, %v677
        %v842 = vsel %vm829, %v841, %v700
        %v843 = vsel %vm831, %v842, %v723
        %v844 = vsel %vm833, %v843, %v746
        %v845 = vsel %vm835, %v844, %v769
        %v846 = vsel %vm837, %v845, %v792
        %v847 = vsel %vm839, %v846, %v815
        %v848 = vadd.f32 %v825, %v840
        %v849 = vadd.f32 %v826, %v847
        %850 = vst [vmem:[#allocation3] sm:$0xff] %v848
        %851 = vst [vmem:[#allocation3 + $0x8] sm:$0xff] %v849
        %v852 = vld [vmem:[#allocation4] sm:$0xff]
        %v853 = vld [vmem:[#allocation4 + $0x8] sm:$0xff]
        %v854 = vsel %vm827, %v479, %v502
        %v855 = vsel %vm829, %v854, %v525
        %v856 = vsel %vm831, %v855, %v548
        %v857 = vsel %vm833, %v856, %v571
        %v858 = vsel %vm835, %v857, %v594
        %v859 = vsel %vm837, %v858, %v617
        %v860 = vsel %vm839, %v859, %v640
        %v861 = vsel %vm827, %v663, %v686
        %v862 = vsel %vm829, %v861, %v709
        %v863 = vsel %vm831, %v862, %v732
        %v864 = vsel %vm833, %v863, %v755
        %v865 = vsel %vm835, %v864, %v778
        %v866 = vsel %vm837, %v865, %v801
        %v867 = vsel %vm839, %v866, %v824
        %v868 = vadd.f32 %v852, %v860
        %v869 = vadd.f32 %v853, %v867
        %870 = vst [vmem:[#allocation4] sm:$0xff] %v868
        %871 = vst [vmem:[#allocation4 + $0x8] sm:$0xff] %v869
      $region40: #{balanced_bce_loss.3} parent=23 // pred_fallthru
        _
      // Predicated region
      $region41: #{balanced_bce_loss.3} parent=23 // pred_check
        %p872 = pneg %p173
      $region42: #{balanced_bce_loss.3} parent=23 // pred_check_branch
        %874 = sbr.rel (%p872) target = $region44
      $region43: #{balanced_bce_loss.3} parent=23 // pred_region
        %s875 = sld [smem:[#allocation6]]
        %s876 = scvt.s32.f32 %s875
        %v877 = vld [vmem:[#allocation3] sm:$0x1]
        %vm878 = vcmask 1040384
        %v879 = vsel %vm878, %v877, 0.0
        %880 = vadd.xlane.f32.xlu0 %v879
        %v881 = vpop.xlane.xlu0 %880
        %v882 = vrot.slane %v881, 4
        %v883 = vadd.f32 %v881, %v882
        %v884 = vrot.slane %v883, 2
        %v885 = vadd.f32 %v883, %v884
        %v886 = vrot.slane %v885, 1
        %v887 = vadd.f32 %v885, %v886
        %s888 = vtos %v887
        %v889 = vld [vmem:[#allocation4] sm:$0x1]
        %v890 = vsel %vm878, %v889, 0.0
        %891 = vadd.xlane.f32.xlu0 %v890
        %v892 = vpop.xlane.xlu0 %891
        %v893 = vrot.slane %v892, 4
        %v894 = vadd.f32 %v892, %v893
        %v895 = vrot.slane %v894, 2
        %v896 = vadd.f32 %v894, %v895
        %v897 = vrot.slane %v896, 1
        %v898 = vadd.f32 %v896, %v897
        %s899 = vtos %v898
        %v900 = vld [vmem:[#allocation3 + $0x1] sm:$0x1]
        %v901 = vsel %vm878, %v900, 0.0
        %902 = vadd.xlane.f32.xlu0 %v901
        %v903 = vpop.xlane.xlu0 %902
        %v904 = vrot.slane %v903, 4
        %v905 = vadd.f32 %v903, %v904
        %v906 = vrot.slane %v905, 2
        %v907 = vadd.f32 %v905, %v906
        %v908 = vrot.slane %v907, 1
        %v909 = vadd.f32 %v907, %v908
        %s910 = vtos %v909
        %v911 = vld [vmem:[#allocation4 + $0x1] sm:$0x1]
        %v912 = vsel %vm878, %v911, 0.0
        %913 = vadd.xlane.f32.xlu0 %v912
        %v914 = vpop.xlane.xlu0 %913
        %v915 = vrot.slane %v914, 4
        %v916 = vadd.f32 %v914, %v915
        %v917 = vrot.slane %v916, 2
        %v918 = vadd.f32 %v916, %v917
        %v919 = vrot.slane %v918, 1
        %v920 = vadd.f32 %v918, %v919
        %s921 = vtos %v920
        %p922 = scmp.ge.f32.partialorder %s910, %s876
        %s923 = scalar_select %p922, 1, 0
        %s924 = scalar_select %p922, %s910, %s888
        %s925 = scalar_select %p922, %s921, %s899
        %v926 = vld [vmem:[#allocation3 + $0x2] sm:$0x1]
        %v927 = vsel %vm878, %v926, 0.0
        %928 = vadd.xlane.f32.xlu0 %v927
        %v929 = vpop.xlane.xlu0 %928
        %v930 = vrot.slane %v929, 4
        %v931 = vadd.f32 %v929, %v930
        %v932 = vrot.slane %v931, 2
        %v933 = vadd.f32 %v931, %v932
        %v934 = vrot.slane %v933, 1
        %v935 = vadd.f32 %v933, %v934
        %s936 = vtos %v935
        %v937 = vld [vmem:[#allocation4 + $0x2] sm:$0x1]
        %v938 = vsel %vm878, %v937, 0.0
        %939 = vadd.xlane.f32.xlu0 %v938
        %v940 = vpop.xlane.xlu0 %939
        %v941 = vrot.slane %v940, 4
        %v942 = vadd.f32 %v940, %v941
        %v943 = vrot.slane %v942, 2
        %v944 = vadd.f32 %v942, %v943
        %v945 = vrot.slane %v944, 1
        %v946 = vadd.f32 %v944, %v945
        %s947 = vtos %v946
        %p948 = scmp.ge.f32.partialorder %s936, %s876
        %s949 = scalar_select %p948, 2, %s923
        %s950 = scalar_select %p948, %s936, %s924
        %s951 = scalar_select %p948, %s947, %s925
        %v952 = vld [vmem:[#allocation3 + $0x3] sm:$0x1]
        %v953 = vsel %vm878, %v952, 0.0
        %954 = vadd.xlane.f32.xlu0 %v953
        %v955 = vpop.xlane.xlu0 %954
        %v956 = vrot.slane %v955, 4
        %v957 = vadd.f32 %v955, %v956
        %v958 = vrot.slane %v957, 2
        %v959 = vadd.f32 %v957, %v958
        %v960 = vrot.slane %v959, 1
        %v961 = vadd.f32 %v959, %v960
        %s962 = vtos %v961
        %v963 = vld [vmem:[#allocation4 + $0x3] sm:$0x1]
        %v964 = vsel %vm878, %v963, 0.0
        %965 = vadd.xlane.f32.xlu0 %v964
        %v966 = vpop.xlane.xlu0 %965
        %v967 = vrot.slane %v966, 4
        %v968 = vadd.f32 %v966, %v967
        %v969 = vrot.slane %v968, 2
        %v970 = vadd.f32 %v968, %v969
        %v971 = vrot.slane %v970, 1
        %v972 = vadd.f32 %v970, %v971
        %s973 = vtos %v972
        %p974 = scmp.ge.f32.partialorder %s962, %s876
        %s975 = scalar_select %p974, 3, %s949
        %s976 = scalar_select %p974, %s962, %s950
        %s977 = scalar_select %p974, %s973, %s951
        %v978 = vld [vmem:[#allocation3 + $0x4] sm:$0x1]
        %v979 = vsel %vm878, %v978, 0.0
        %980 = vadd.xlane.f32.xlu0 %v979
        %v981 = vpop.xlane.xlu0 %980
        %v982 = vrot.slane %v981, 4
        %v983 = vadd.f32 %v981, %v982
        %v984 = vrot.slane %v983, 2
        %v985 = vadd.f32 %v983, %v984
        %v986 = vrot.slane %v985, 1
        %v987 = vadd.f32 %v985, %v986
        %s988 = vtos %v987
        %v989 = vld [vmem:[#allocation4 + $0x4] sm:$0x1]
        %v990 = vsel %vm878, %v989, 0.0
        %991 = vadd.xlane.f32.xlu0 %v990
        %v992 = vpop.xlane.xlu0 %991
        %v993 = vrot.slane %v992, 4
        %v994 = vadd.f32 %v992, %v993
        %v995 = vrot.slane %v994, 2
        %v996 = vadd.f32 %v994, %v995
        %v997 = vrot.slane %v996, 1
        %v998 = vadd.f32 %v996, %v997
        %s999 = vtos %v998
        %p1000 = scmp.ge.f32.partialorder %s988, %s876
        %s1001 = scalar_select %p1000, 4, %s975
        %s1002 = scalar_select %p1000, %s988, %s976
        %s1003 = scalar_select %p1000, %s999, %s977
        %v1004 = vld [vmem:[#allocation3 + $0x5] sm:$0x1]
        %v1005 = vsel %vm878, %v1004, 0.0
        %1006 = vadd.xlane.f32.xlu0 %v1005
        %v1007 = vpop.xlane.xlu0 %1006
        %v1008 = vrot.slane %v1007, 4
        %v1009 = vadd.f32 %v1007, %v1008
        %v1010 = vrot.slane %v1009, 2
        %v1011 = vadd.f32 %v1009, %v1010
        %v1012 = vrot.slane %v1011, 1
        %v1013 = vadd.f32 %v1011, %v1012
        %s1014 = vtos %v1013
        %v1015 = vld [vmem:[#allocation4 + $0x5] sm:$0x1]
        %v1016 = vsel %vm878, %v1015, 0.0
        %1017 = vadd.xlane.f32.xlu0 %v1016
        %v1018 = vpop.xlane.xlu0 %1017
        %v1019 = vrot.slane %v1018, 4
        %v1020 = vadd.f32 %v1018, %v1019
        %v1021 = vrot.slane %v1020, 2
        %v1022 = vadd.f32 %v1020, %v1021
        %v1023 = vrot.slane %v1022, 1
        %v1024 = vadd.f32 %v1022, %v1023
        %s1025 = vtos %v1024
        %p1026 = scmp.ge.f32.partialorder %s1014, %s876
        %s1027 = scalar_select %p1026, 5, %s1001
        %s1028 = scalar_select %p1026, %s1014, %s1002
        %s1029 = scalar_select %p1026, %s1025, %s1003
        %v1030 = vld [vmem:[#allocation3 + $0x6] sm:$0x1]
        %v1031 = vsel %vm878, %v1030, 0.0
        %1032 = vadd.xlane.f32.xlu0 %v1031
        %v1033 = vpop.xlane.xlu0 %1032
        %v1034 = vrot.slane %v1033, 4
        %v1035 = vadd.f32 %v1033, %v1034
        %v1036 = vrot.slane %v1035, 2
        %v1037 = vadd.f32 %v1035, %v1036
        %v1038 = vrot.slane %v1037, 1
        %v1039 = vadd.f32 %v1037, %v1038
        %s1040 = vtos %v1039
        %v1041 = vld [vmem:[#allocation4 + $0x6] sm:$0x1]
        %v1042 = vsel %vm878, %v1041, 0.0
        %1043 = vadd.xlane.f32.xlu0 %v1042
        %v1044 = vpop.xlane.xlu0 %1043
        %v1045 = vrot.slane %v1044, 4
        %v1046 = vadd.f32 %v1044, %v1045
        %v1047 = vrot.slane %v1046, 2
        %v1048 = vadd.f32 %v1046, %v1047
        %v1049 = vrot.slane %v1048, 1
        %v1050 = vadd.f32 %v1048, %v1049
        %s1051 = vtos %v1050
        %p1052 = scmp.ge.f32.partialorder %s1040, %s876
        %s1053 = scalar_select %p1052, 6, %s1027
        %s1054 = scalar_select %p1052, %s1040, %s1028
        %s1055 = scalar_select %p1052, %s1051, %s1029
        %v1056 = vld [vmem:[#allocation3 + $0x7] sm:$0x1]
        %v1057 = vsel %vm878, %v1056, 0.0
        %1058 = vadd.xlane.f32.xlu0 %v1057
        %v1059 = vpop.xlane.xlu0 %1058
        %v1060 = vrot.slane %v1059, 4
        %v1061 = vadd.f32 %v1059, %v1060
        %v1062 = vrot.slane %v1061, 2
        %v1063 = vadd.f32 %v1061, %v1062
        %v1064 = vrot.slane %v1063, 1
        %v1065 = vadd.f32 %v1063, %v1064
        %s1066 = vtos %v1065
        %v1067 = vld [vmem:[#allocation4 + $0x7] sm:$0x1]
        %v1068 = vsel %vm878, %v1067, 0.0
        %1069 = vadd.xlane.f32.xlu0 %v1068
        %v1070 = vpop.xlane.xlu0 %1069
        %v1071 = vrot.slane %v1070, 4
        %v1072 = vadd.f32 %v1070, %v1071
        %v1073 = vrot.slane %v1072, 2
        %v1074 = vadd.f32 %v1072, %v1073
        %v1075 = vrot.slane %v1074, 1
        %v1076 = vadd.f32 %v1074, %v1075
        %s1077 = vtos %v1076
        %p1078 = scmp.ge.f32.partialorder %s1066, %s876
        %s1079 = scalar_select %p1078, 7, %s1053
        %s1080 = scalar_select %p1078, %s1066, %s1054
        %s1081 = scalar_select %p1078, %s1077, %s1055
        %v1082 = vld [vmem:[#allocation3 + $0x8] sm:$0x1]
        %v1083 = vsel %vm878, %v1082, 0.0
        %1084 = vadd.xlane.f32.xlu0 %v1083
        %v1085 = vpop.xlane.xlu0 %1084
        %v1086 = vrot.slane %v1085, 4
        %v1087 = vadd.f32 %v1085, %v1086
        %v1088 = vrot.slane %v1087, 2
        %v1089 = vadd.f32 %v1087, %v1088
        %v1090 = vrot.slane %v1089, 1
        %v1091 = vadd.f32 %v1089, %v1090
        %s1092 = vtos %v1091
        %v1093 = vld [vmem:[#allocation4 + $0x8] sm:$0x1]
        %v1094 = vsel %vm878, %v1093, 0.0
        %1095 = vadd.xlane.f32.xlu0 %v1094
        %v1096 = vpop.xlane.xlu0 %1095
        %v1097 = vrot.slane %v1096, 4
        %v1098 = vadd.f32 %v1096, %v1097
        %v1099 = vrot.slane %v1098, 2
        %v1100 = vadd.f32 %v1098, %v1099
        %v1101 = vrot.slane %v1100, 1
        %v1102 = vadd.f32 %v1100, %v1101
        %s1103 = vtos %v1102
        %p1104 = scmp.ge.f32.partialorder %s1092, %s876
        %s1105 = scalar_select %p1104, 8, %s1079
        %s1106 = scalar_select %p1104, %s1092, %s1080
        %s1107 = scalar_select %p1104, %s1103, %s1081
        %v1108 = vld [vmem:[#allocation3 + $0x9] sm:$0x1]
        %v1109 = vsel %vm878, %v1108, 0.0
        %1110 = vadd.xlane.f32.xlu0 %v1109
        %v1111 = vpop.xlane.xlu0 %1110
        %v1112 = vrot.slane %v1111, 4
        %v1113 = vadd.f32 %v1111, %v1112
        %v1114 = vrot.slane %v1113, 2
        %v1115 = vadd.f32 %v1113, %v1114
        %v1116 = vrot.slane %v1115, 1
        %v1117 = vadd.f32 %v1115, %v1116
        %s1118 = vtos %v1117
        %v1119 = vld [vmem:[#allocation4 + $0x9] sm:$0x1]
        %v1120 = vsel %vm878, %v1119, 0.0
        %1121 = vadd.xlane.f32.xlu0 %v1120
        %v1122 = vpop.xlane.xlu0 %1121
        %v1123 = vrot.slane %v1122, 4
        %v1124 = vadd.f32 %v1122, %v1123
        %v1125 = vrot.slane %v1124, 2
        %v1126 = vadd.f32 %v1124, %v1125
        %v1127 = vrot.slane %v1126, 1
        %v1128 = vadd.f32 %v1126, %v1127
        %s1129 = vtos %v1128
        %p1130 = scmp.ge.f32.partialorder %s1118, %s876
        %s1131 = scalar_select %p1130, 9, %s1105
        %s1132 = scalar_select %p1130, %s1118, %s1106
        %s1133 = scalar_select %p1130, %s1129, %s1107
        %v1134 = vld [vmem:[#allocation3 + $0xa] sm:$0x1]
        %v1135 = vsel %vm878, %v1134, 0.0
        %1136 = vadd.xlane.f32.xlu0 %v1135
        %v1137 = vpop.xlane.xlu0 %1136
        %v1138 = vrot.slane %v1137, 4
        %v1139 = vadd.f32 %v1137, %v1138
        %v1140 = vrot.slane %v1139, 2
        %v1141 = vadd.f32 %v1139, %v1140
        %v1142 = vrot.slane %v1141, 1
        %v1143 = vadd.f32 %v1141, %v1142
        %s1144 = vtos %v1143
        %v1145 = vld [vmem:[#allocation4 + $0xa] sm:$0x1]
        %v1146 = vsel %vm878, %v1145, 0.0
        %1147 = vadd.xlane.f32.xlu0 %v1146
        %v1148 = vpop.xlane.xlu0 %1147
        %v1149 = vrot.slane %v1148, 4
        %v1150 = vadd.f32 %v1148, %v1149
        %v1151 = vrot.slane %v1150, 2
        %v1152 = vadd.f32 %v1150, %v1151
        %v1153 = vrot.slane %v1152, 1
        %v1154 = vadd.f32 %v1152, %v1153
        %s1155 = vtos %v1154
        %p1156 = scmp.ge.f32.partialorder %s1144, %s876
        %s1157 = scalar_select %p1156, 10, %s1131
        %s1158 = scalar_select %p1156, %s1144, %s1132
        %s1159 = scalar_select %p1156, %s1155, %s1133
        %v1160 = vld [vmem:[#allocation3 + $0xb] sm:$0x1]
        %v1161 = vsel %vm878, %v1160, 0.0
        %1162 = vadd.xlane.f32.xlu0 %v1161
        %v1163 = vpop.xlane.xlu0 %1162
        %v1164 = vrot.slane %v1163, 4
        %v1165 = vadd.f32 %v1163, %v1164
        %v1166 = vrot.slane %v1165, 2
        %v1167 = vadd.f32 %v1165, %v1166
        %v1168 = vrot.slane %v1167, 1
        %v1169 = vadd.f32 %v1167, %v1168
        %s1170 = vtos %v1169
        %v1171 = vld [vmem:[#allocation4 + $0xb] sm:$0x1]
        %v1172 = vsel %vm878, %v1171, 0.0
        %1173 = vadd.xlane.f32.xlu0 %v1172
        %v1174 = vpop.xlane.xlu0 %1173
        %v1175 = vrot.slane %v1174, 4
        %v1176 = vadd.f32 %v1174, %v1175
        %v1177 = vrot.slane %v1176, 2
        %v1178 = vadd.f32 %v1176, %v1177
        %v1179 = vrot.slane %v1178, 1
        %v1180 = vadd.f32 %v1178, %v1179
        %s1181 = vtos %v1180
        %p1182 = scmp.ge.f32.partialorder %s1170, %s876
        %s1183 = scalar_select %p1182, 11, %s1157
        %s1184 = scalar_select %p1182, %s1170, %s1158
        %s1185 = scalar_select %p1182, %s1181, %s1159
        %v1186 = vld [vmem:[#allocation3 + $0xc] sm:$0x1]
        %v1187 = vsel %vm878, %v1186, 0.0
        %1188 = vadd.xlane.f32.xlu0 %v1187
        %v1189 = vpop.xlane.xlu0 %1188
        %v1190 = vrot.slane %v1189, 4
        %v1191 = vadd.f32 %v1189, %v1190
        %v1192 = vrot.slane %v1191, 2
        %v1193 = vadd.f32 %v1191, %v1192
        %v1194 = vrot.slane %v1193, 1
        %v1195 = vadd.f32 %v1193, %v1194
        %s1196 = vtos %v1195
        %v1197 = vld [vmem:[#allocation4 + $0xc] sm:$0x1]
        %v1198 = vsel %vm878, %v1197, 0.0
        %1199 = vadd.xlane.f32.xlu0 %v1198
        %v1200 = vpop.xlane.xlu0 %1199
        %v1201 = vrot.slane %v1200, 4
        %v1202 = vadd.f32 %v1200, %v1201
        %v1203 = vrot.slane %v1202, 2
        %v1204 = vadd.f32 %v1202, %v1203
        %v1205 = vrot.slane %v1204, 1
        %v1206 = vadd.f32 %v1204, %v1205
        %s1207 = vtos %v1206
        %p1208 = scmp.ge.f32.partialorder %s1196, %s876
        %s1209 = scalar_select %p1208, 12, %s1183
        %s1210 = scalar_select %p1208, %s1196, %s1184
        %s1211 = scalar_select %p1208, %s1207, %s1185
        %v1212 = vld [vmem:[#allocation3 + $0xd] sm:$0x1]
        %v1213 = vsel %vm878, %v1212, 0.0
        %1214 = vadd.xlane.f32.xlu0 %v1213
        %v1215 = vpop.xlane.xlu0 %1214
        %v1216 = vrot.slane %v1215, 4
        %v1217 = vadd.f32 %v1215, %v1216
        %v1218 = vrot.slane %v1217, 2
        %v1219 = vadd.f32 %v1217, %v1218
        %v1220 = vrot.slane %v1219, 1
        %v1221 = vadd.f32 %v1219, %v1220
        %s1222 = vtos %v1221
        %v1223 = vld [vmem:[#allocation4 + $0xd] sm:$0x1]
        %v1224 = vsel %vm878, %v1223, 0.0
        %1225 = vadd.xlane.f32.xlu0 %v1224
        %v1226 = vpop.xlane.xlu0 %1225
        %v1227 = vrot.slane %v1226, 4
        %v1228 = vadd.f32 %v1226, %v1227
        %v1229 = vrot.slane %v1228, 2
        %v1230 = vadd.f32 %v1228, %v1229
        %v1231 = vrot.slane %v1230, 1
        %v1232 = vadd.f32 %v1230, %v1231
        %s1233 = vtos %v1232
        %p1234 = scmp.ge.f32.partialorder %s1222, %s876
        %s1235 = scalar_select %p1234, 13, %s1209
        %s1236 = scalar_select %p1234, %s1222, %s1210
        %s1237 = scalar_select %p1234, %s1233, %s1211
        %v1238 = vld [vmem:[#allocation3 + $0xe] sm:$0x1]
        %v1239 = vsel %vm878, %v1238, 0.0
        %1240 = vadd.xlane.f32.xlu0 %v1239
        %v1241 = vpop.xlane.xlu0 %1240
        %v1242 = vrot.slane %v1241, 4
        %v1243 = vadd.f32 %v1241, %v1242
        %v1244 = vrot.slane %v1243, 2
        %v1245 = vadd.f32 %v1243, %v1244
        %v1246 = vrot.slane %v1245, 1
        %v1247 = vadd.f32 %v1245, %v1246
        %s1248 = vtos %v1247
        %v1249 = vld [vmem:[#allocation4 + $0xe] sm:$0x1]
        %v1250 = vsel %vm878, %v1249, 0.0
        %1251 = vadd.xlane.f32.xlu0 %v1250
        %v1252 = vpop.xlane.xlu0 %1251
        %v1253 = vrot.slane %v1252, 4
        %v1254 = vadd.f32 %v1252, %v1253
        %v1255 = vrot.slane %v1254, 2
        %v1256 = vadd.f32 %v1254, %v1255
        %v1257 = vrot.slane %v1256, 1
        %v1258 = vadd.f32 %v1256, %v1257
        %s1259 = vtos %v1258
        %p1260 = scmp.ge.f32.partialorder %s1248, %s876
        %s1261 = scalar_select %p1260, 14, %s1235
        %s1262 = scalar_select %p1260, %s1248, %s1236
        %s1263 = scalar_select %p1260, %s1259, %s1237
        %v1264 = vld [vmem:[#allocation3 + $0xf] sm:$0x1]
        %v1265 = vsel %vm878, %v1264, 0.0
        %1266 = vadd.xlane.f32.xlu0 %v1265
        %v1267 = vpop.xlane.xlu0 %1266
        %v1268 = vrot.slane %v1267, 4
        %v1269 = vadd.f32 %v1267, %v1268
        %v1270 = vrot.slane %v1269, 2
        %v1271 = vadd.f32 %v1269, %v1270
        %v1272 = vrot.slane %v1271, 1
        %v1273 = vadd.f32 %v1271, %v1272
        %s1274 = vtos %v1273
        %v1275 = vld [vmem:[#allocation4 + $0xf] sm:$0x1]
        %v1276 = vsel %vm878, %v1275, 0.0
        %1277 = vadd.xlane.f32.xlu0 %v1276
        %v1278 = vpop.xlane.xlu0 %1277
        %v1279 = vrot.slane %v1278, 4
        %v1280 = vadd.f32 %v1278, %v1279
        %v1281 = vrot.slane %v1280, 2
        %v1282 = vadd.f32 %v1280, %v1281
        %v1283 = vrot.slane %v1282, 1
        %v1284 = vadd.f32 %v1282, %v1283
        %s1285 = vtos %v1284
        %p1286 = scmp.ge.f32.partialorder %s1274, %s876
        %s1287 = scalar_select %p1286, 15, %s1261
        %s1288 = scalar_select %p1286, %s1274, %s1262
        %s1289 = scalar_select %p1286, %s1285, %s1263
        %s1290 = sshll.u32 %s1287, %s192
        %s1291 = sadd.s32 %s193, %s1290
        %s1292 = scalar_lea.smem [#allocation2], 0
        %1293 = sst [smem:[%s1292]] %s1291
        // Predicated region
        $region45: #{balanced_bce_loss.3} parent=43 // pred_check
          %p1294 = pneg %p451
        $region46: #{balanced_bce_loss.3} parent=43 // pred_check_branch
          %1296 = sbr.rel (%p1294) target = $region48
        $region47: #{balanced_bce_loss.3} parent=43 // pred_region
          %v1297 = vstv %s1289
          %1298 = vst [vmem:[%s2] sm:$0x1] %v1297
          %v1299 = vstv %s1288
          %1300 = vst [vmem:[%s3] sm:$0x1] %v1299
          %v1301 = vstv %s1291
          %1302 = vst [vmem:[%s4] sm:$0x1] %v1301
        $region48: #{balanced_bce_loss.3} parent=43 // pred_fallthru
          _
      $region44: #{balanced_bce_loss.3} parent=23 // pred_fallthru
        _
      // Predicated region
      $region49: #{balanced_bce_loss.3} parent=23 // pred_check
        %p1303 = pneg %p73
      $region50: #{balanced_bce_loss.3} parent=23 // pred_check_branch
        %1305 = sbr.rel (%p1303) target = $region52
      $region51: #{balanced_bce_loss.3} parent=23 // pred_region
        _
      $region52: #{balanced_bce_loss.3} parent=23 // pred_fallthru
        _
      // Predicated region
      $region53: #{balanced_bce_loss.3} parent=23 // pred_check
        %p1306 = pneg %p94
      $region54: #{balanced_bce_loss.3} parent=23 // pred_check_branch
        %1308 = sbr.rel (%p1306) target = $region56
      $region55: #{balanced_bce_loss.3} parent=23 // pred_region
        _
      $region56: #{balanced_bce_loss.3} parent=23 // pred_fallthru
        _
      // Predicated region
      $region57: #{balanced_bce_loss.3} parent=23 // pred_check
        %p1309 = pneg %p115
      $region58: #{balanced_bce_loss.3} parent=23 // pred_check_branch
        %1311 = sbr.rel (%p1309) target = $region60
      $region59: #{balanced_bce_loss.3} parent=23 // pred_region
        _
      $region60: #{balanced_bce_loss.3} parent=23 // pred_fallthru
        _
      // Predicated region
      $region61: #{balanced_bce_loss.3} parent=23 // pred_check
        %p1312 = pneg %p73
      $region62: #{balanced_bce_loss.3} parent=23 // pred_check_branch
        %1314 = sbr.rel (%p1312) target = $region64
      $region63: #{balanced_bce_loss.3} parent=23 // pred_region
        _
      $region64: #{balanced_bce_loss.3} parent=23 // pred_fallthru
        _
      // Predicated region
      $region65: #{balanced_bce_loss.3} parent=23 // pred_check
        %p1315 = pneg %p94
      $region66: #{balanced_bce_loss.3} parent=23 // pred_check_branch
        %1317 = sbr.rel (%p1315) target = $region68
      $region67: #{balanced_bce_loss.3} parent=23 // pred_region
        _
      $region68: #{balanced_bce_loss.3} parent=23 // pred_fallthru
        _
      // Predicated region
      $region69: #{balanced_bce_loss.3} parent=23 // pred_check
        %p1318 = pneg %p115
      $region70: #{balanced_bce_loss.3} parent=23 // pred_check_branch
        %1320 = sbr.rel (%p1318) target = $region72
      $region71: #{balanced_bce_loss.3} parent=23 // pred_region
        _
      $region72: #{balanced_bce_loss.3} parent=23 // pred_fallthru
        _
    $region24: #{balanced_bce_loss.3} parent=5 // pred_fallthru
      _
    %p1321 = scmp.le.s32.totalorder 2, %s17
    // Predicated region
    $region73: #{balanced_bce_loss.3} parent=5 // pred_check
      %p1322 = pneg %p1321
    $region74: #{balanced_bce_loss.3} parent=5 // pred_check_branch
      %1324 = sbr.rel (%p1322) target = $region76
    $region75: #{balanced_bce_loss.3} parent=5 // pred_region
      %s1325 = ssub.s32 %s17, 2
    $region76: #{balanced_bce_loss.3} parent=5 // pred_fallthru
      _
  $region6: #{balanced_bce_loss.3} parent=0 // loop_footer
    %s21 = sadd.s32 1, %s17
  $region7: #{balanced_bce_loss.3} parent=0 // loop_footer_branch
    %16 = sbr.rel target = $region3
  $region8: #{balanced_bce_loss.3} parent=0 // loop_exit
    _

</llo_original>
